<compile_context>
chip_gen: v5e
topology: v5e:2x2
jax: 0.10.0
libtpu: 0.0.40
codegen_flags: <defaults>
</compile_context>

<pallas_src>
import numpy as np

import jax
import jax.numpy as jnp
from jax import lax
from jax.experimental import pallas as pl
from jax.experimental.pallas import tpu as pltpu


# ----------------------------------------------------------------------------
# In-kernel building blocks (traced inside the single Pallas kernel)
# ----------------------------------------------------------------------------
def _shift_flat(x, offset):
    """out[..., q] = x[..., (q + offset) % Q]  (circular lane roll on the XLU).

    Wraparound only pollutes positions that are never read by any valid
    downstream output (max accumulated offset per 256-lane image is 238 < 256),
    so circular rolls are safe everywhere in this kernel.
    """
    if offset == 0:
        return x
    q = x.shape[-1]
    return pltpu.roll(x, shift=(q - offset) % q, axis=x.ndim - 1)


def _conv2x2_relu(x, w_ref, b_ref, dr, dc):
    """Valid 2x2 cross-correlation + bias + relu on flat (cin, Q) activations.

    w_ref: (4, cout, cin) with taps ordered (kh, kw); b_ref: (cout, 1).
    (dr, dc) are the flat lane offsets of one row / one column step of the
    *current* (possibly pool-strided) grid.  Tap shift = lane roll (XLU),
    channel contraction = small MXU matmul.
    """
    acc = None
    for kh in range(2):
        for kw in range(2):
            xs = _shift_flat(x, kh * dr + kw * dc)                 # (cin, Q)
            t = jnp.dot(w_ref[kh * 2 + kw], xs,
                        preferred_element_type=jnp.float32)        # (cout, Q)
            acc = t if acc is None else acc + t
    return jnp.maximum(acc + b_ref[...], 0.0)


def _pool2x2(x, dr, dc):
    """2x2 / stride-2 / floor-mode max pool on flat (c, Q) activations.

    Produces the window max at every top-left corner; no subsampling is done
    (the stride-2 result lives on a 2x coarser subgrid and downstream stages
    use 2x larger roll offsets).  Pure rolls + elementwise max.
    """
    m = x
    for dh in range(2):
        for dw in range(2):
            if dh == 0 and dw == 0:
                continue
            m = jnp.maximum(m, _shift_flat(x, dh * dr + dw * dc))
    return m


def _vanilla_cnn_kernel(x_ref, w1_ref, b1_ref, w2_ref, b2_ref, sel_ref, msk_ref,
                        wf1_ref, bf1_ref, wf2_ref, bf2_ref, wf3_ref, bf3_ref,
                        o_ref):
    B = o_ref.shape[0]
    nfeat = wf1_ref.shape[0]                        # 144 = 16 * 3 * 3

    x = x_ref[...]                                  # (3, B*256), lane-dense

    # conv1+relu on the stride-1 grid; pool1 -> results on the stride-2 subgrid
    h1 = _conv2x2_relu(x, w1_ref, b1_ref, 16, 1)    # (6,  B*256)
    p1 = _pool2x2(h1, 16, 1)
    # conv2+relu / pool2 on the stride-2 grid -> results on the stride-4 subgrid
    h2 = _conv2x2_relu(p1, w2_ref, b2_ref, 32, 2)   # (16, B*256)
    p2 = _pool2x2(h2, 32, 2)

    # torch.flatten(x, 1): gather the 9 valid stride-4 lanes per image and lay
    # them out (c, i, j)-major as (B, 144).  One MXU selection matmul picks the
    # lanes; the 0/1 channel mask + sublane sum picks the matching channel row.
    sel = jnp.dot(p2, sel_ref[...], preferred_element_type=jnp.float32)   # (16, B*144)
    flat = jnp.sum(sel * msk_ref[...], axis=0, keepdims=True)             # (1,  B*144)
    feat = jnp.concatenate(
        [flat[:, b * nfeat:(b + 1) * nfeat] for b in range(B)], axis=0)   # (B, 144)

    # fc1 -> relu -> fc2 -> relu -> fc3: three plain 2-D MXU matmuls
    h = jnp.maximum(
        jnp.dot(feat, wf1_ref[...], preferred_element_type=jnp.float32)
        + bf1_ref[...], 0.0)
    h = jnp.maximum(
        jnp.dot(h, wf2_ref[...], preferred_element_type=jnp.float32)
        + bf2_ref[...], 0.0)
    out = jnp.dot(h, wf3_ref[...], preferred_element_type=jnp.float32) + bf3_ref[...]
    o_ref[...] = out.astype(o_ref.dtype)


# ----------------------------------------------------------------------------
# Wrapper: one pallas_call, everything resident in VMEM
# ----------------------------------------------------------------------------
def _make_gather_constants(batch):
    """Selection matmul weight (B*256, B*144) + channel mask (16, B*144).

    Column b*144 + c*9 + (i*3 + j) of `sel` is one-hot at lane b*256 + 64*i + 4*j
    (the flat position where pool2 output (i, j) of image b lives after the
    stride-4 subgrid scheme); `msk` marks which channel sublane feeds that column.
    """
    hw = 16 * 16
    sel = np.zeros((batch * hw, batch * 144), np.float32)
    msk = np.zeros((16, batch * 144), np.float32)
    for b in range(batch):
        for c in range(16):
            for i in range(3):
                for j in range(3):
                    col = b * 144 + c * 9 + i * 3 + j
                    sel[b * hw + 64 * i + 4 * j, col] = 1.0
                    msk[c, col] = 1.0
    return jnp.asarray(sel), jnp.asarray(msk)


def vanilla_cnn_forward(x_nchw, kp):
    """Forward pass of VanillaCNN; x_nchw is (B, 3, 16, 16) like the PyTorch module."""
    B, C, H, W = x_nchw.shape
    assert (C, H, W) == (3, 16, 16), "VanillaCNN geometry requires 3x16x16 inputs"
    # NCHW -> lane-dense (C, B*H*W): one-off layout plumbing outside the kernel.
    x = jnp.transpose(x_nchw, (1, 0, 2, 3)).reshape(C, B * H * W)
    sel, msk = _make_gather_constants(B)
    args = (x, kp["w1"], kp["b1"], kp["w2"], kp["b2"], sel, msk,
            kp["wf1"], kp["bf1"], kp["wf2"], kp["bf2"], kp["wf3"], kp["bf3"])
    vmem = pl.BlockSpec(memory_space=pltpu.MemorySpace.VMEM)
    return pl.pallas_call(
        _vanilla_cnn_kernel,
        out_shape=jax.ShapeDtypeStruct((B, 10), jnp.float32),
        in_specs=[vmem] * len(args),
        out_specs=vmem,
        compiler_params=pltpu.CompilerParams(
            vmem_limit_bytes=32 * 1024 * 1024,   # comfortable on v5e/v6e/v7x
        ),
    )(*args)


# ----------------------------------------------------------------------------
# Parameters: generated in PyTorch layouts, then converted to kernel layouts
# ----------------------------------------------------------------------------
def init_torch_params(key):
    """Deterministic synthetic params in the exact nn.Module shapes/init style."""
    ks = jax.random.split(key, 10)

    def u(k, shape, fan_in):
        b = 1.0 / (fan_in ** 0.5)
        return jax.random.uniform(k, shape, jnp.float32, -b, b)

    return {
        "conv1_w": u(ks[0], (6, 3, 2, 2), 3 * 2 * 2),     # (out, in, kh, kw)
        "conv1_b": u(ks[1], (6,), 3 * 2 * 2),
        "conv2_w": u(ks[2], (16, 6, 2, 2), 6 * 2 * 2),
        "conv2_b": u(ks[3], (16,), 6 * 2 * 2),
        "fc1_w": u(ks[4], (64, 16 * 3 * 3), 16 * 3 * 3),  # (out, in), in ordered (c,h,w)
        "fc1_b": u(ks[5], (64,), 16 * 3 * 3),
        "fc2_w": u(ks[6], (32, 64), 64),
        "fc2_b": u(ks[7], (32,), 64),
        "fc3_w": u(ks[8], (10, 32), 32),
        "fc3_b": u(ks[9], (10,), 32),
    }


def prepare_params(tp):
    """One-time conversion of torch-layout params to the kernel layouts."""
    # conv weights -> (4, cout, cin), taps ordered (kh, kw)
    w1 = jnp.transpose(tp["conv1_w"], (2, 3, 0, 1)).reshape(4, 6, 3)
    w2 = jnp.transpose(tp["conv2_w"], (2, 3, 0, 1)).reshape(4, 16, 6)
    # fc1: the kernel's flattened feature order is (c, i, j) == torch.flatten
    # order on NCHW, so wf1 is just the plain transpose (no permutation).
    return {
        "w1": w1, "b1": tp["conv1_b"].reshape(6, 1),
        "w2": w2, "b2": tp["conv2_b"].reshape(16, 1),
        "wf1": tp["fc1_w"].T, "bf1": tp["fc1_b"].reshape(1, 64),
        "wf2": tp["fc2_w"].T, "bf2": tp["fc2_b"].reshape(1, 32),
        "wf3": tp["fc3_w"].T, "bf3": tp["fc3_b"].reshape(1, 10),
    }


# ----------------------------------------------------------------------------
# Pure-XLA reference (mirrors the PyTorch module) for a one-off sanity check
# ----------------------------------------------------------------------------
def _reference_forward(x_nchw, tp):
    dn = ("NCHW", "OIHW", "NCHW")
    y = lax.conv_general_dilated(x_nchw, tp["conv1_w"], (1, 1), "VALID",
                                 dimension_numbers=dn)
    y = jnp.maximum(y + tp["conv1_b"][None, :, None, None], 0.0)
    y = lax.reduce_window(y, -jnp.inf, lax.max, (1, 1, 2, 2), (1, 1, 2, 2), "VALID")
    y = lax.conv_general_dilated(y, tp["conv2_w"], (1, 1), "VALID",
                                 dimension_numbers=dn)
    y = jnp.maximum(y + tp["conv2_b"][None, :, None, None], 0.0)
    y = lax.reduce_window(y, -jnp.inf, lax.max, (1, 1, 2, 2), (1, 1, 2, 2), "VALID")
    y = y.reshape(y.shape[0], -1)                      # torch.flatten(x, 1) on NCHW
    y = jnp.maximum(y @ tp["fc1_w"].T + tp["fc1_b"], 0.0)
    y = jnp.maximum(y @ tp["fc2_w"].T + tp["fc2_b"], 0.0)
    return y @ tp["fc3_w"].T + tp["fc3_b"]


if __name__ == "__main__":
    key = jax.random.PRNGKey(0)
    k_x, k_p = jax.random.split(key)

    # PyTorch-convention NCHW input: batch=2, channels=3, 16x16 spatial
    x = jax.random.normal(k_x, (2, 3, 16, 16), jnp.float32)
    torch_params = init_torch_params(k_p)
    kernel_params = prepare_params(torch_params)

    fwd = jax.jit(vanilla_cnn_forward)
    out = jax.block_until_ready(fwd(x, kernel_params))
    assert out.shape == (2, 10) and out.dtype == jnp.float32

    ref = _reference_forward(x, torch_params)
    assert jnp.allclose(out, ref, atol=2e-4, rtol=2e-4), (
        "kernel/reference mismatch, max abs err = "
        f"{float(jnp.max(jnp.abs(out - ref)))}")

    print("KERNEL_OK")
</pallas_src>

<mosaic_0001>
module attributes {stable_mosaic.version = 11 : i64} {
  func.func @_vanilla_cnn_kernel(%arg0: memref<3x512xf32, #tpu.memory_space<vmem>>, %arg1: memref<4x6x3xf32, #tpu.memory_space<vmem>>, %arg2: memref<6x1xf32, #tpu.memory_space<vmem>>, %arg3: memref<4x16x6xf32, #tpu.memory_space<vmem>>, %arg4: memref<16x1xf32, #tpu.memory_space<vmem>>, %arg5: memref<512x288xf32, #tpu.memory_space<vmem>>, %arg6: memref<16x288xf32, #tpu.memory_space<vmem>>, %arg7: memref<144x64xf32, #tpu.memory_space<vmem>>, %arg8: memref<1x64xf32, #tpu.memory_space<vmem>>, %arg9: memref<64x32xf32, #tpu.memory_space<vmem>>, %arg10: memref<1x32xf32, #tpu.memory_space<vmem>>, %arg11: memref<32x10xf32, #tpu.memory_space<vmem>>, %arg12: memref<1x10xf32, #tpu.memory_space<vmem>>, %arg13: memref<2x10xf32, #tpu.memory_space<vmem>>) attributes {dimension_semantics = [], scalar_prefetch = 0 : i64, scratch_operands = 0 : i64, tpu.core_type = #tpu.core_type<tc>} {
    %c0 = arith.constant 0 : index
    %c0_0 = arith.constant 0 : index
    %0 = vector.load %arg0[%c0, %c0_0] : memref<3x512xf32, #tpu.memory_space<vmem>>, vector<3x512xf32>
    %c0_1 = arith.constant 0 : index
    %c0_2 = arith.constant 0 : index
    %c0_3 = arith.constant 0 : index
    %1 = vector.load %arg1[%c0_1, %c0_2, %c0_3] : memref<4x6x3xf32, #tpu.memory_space<vmem>>, vector<1x6x3xf32>
    %2 = vector.shape_cast %1 : vector<1x6x3xf32> to vector<6x3xf32>
    %cst = arith.constant dense<0.000000e+00> : vector<6x512xf32>
    %3 = tpu.matmul %2, %0, %cst {dimension_numbers = #tpu.dot_dimension_numbers<[1], [0], [0], [1], [0, 0, 1, 1], [], []>} : vector<6x3xf32>, vector<3x512xf32>, vector<6x512xf32> -> vector<6x512xf32>
    %c511_i32 = arith.constant 511 : i32
    %4 = tpu.dynamic_rotate %0 by %c511_i32 dim 1 : vector<3x512xf32>, i32 -> vector<3x512xf32>
    %c1 = arith.constant 1 : index
    %c0_4 = arith.constant 0 : index
    %c0_5 = arith.constant 0 : index
    %5 = vector.load %arg1[%c1, %c0_4, %c0_5] : memref<4x6x3xf32, #tpu.memory_space<vmem>>, vector<1x6x3xf32>
    %6 = vector.shape_cast %5 : vector<1x6x3xf32> to vector<6x3xf32>
    %cst_6 = arith.constant dense<0.000000e+00> : vector<6x512xf32>
    %7 = tpu.matmul %6, %4, %cst_6 {dimension_numbers = #tpu.dot_dimension_numbers<[1], [0], [0], [1], [0, 0, 1, 1], [], []>} : vector<6x3xf32>, vector<3x512xf32>, vector<6x512xf32> -> vector<6x512xf32>
    %8 = arith.addf %3, %7 : vector<6x512xf32>
    %c496_i32 = arith.constant 496 : i32
    %9 = tpu.dynamic_rotate %0 by %c496_i32 dim 1 : vector<3x512xf32>, i32 -> vector<3x512xf32>
    %c2 = arith.constant 2 : index
    %c0_7 = arith.constant 0 : index
    %c0_8 = arith.constant 0 : index
    %10 = vector.load %arg1[%c2, %c0_7, %c0_8] : memref<4x6x3xf32, #tpu.memory_space<vmem>>, vector<1x6x3xf32>
    %11 = vector.shape_cast %10 : vector<1x6x3xf32> to vector<6x3xf32>
    %cst_9 = arith.constant dense<0.000000e+00> : vector<6x512xf32>
    %12 = tpu.matmul %11, %9, %cst_9 {dimension_numbers = #tpu.dot_dimension_numbers<[1], [0], [0], [1], [0, 0, 1, 1], [], []>} : vector<6x3xf32>, vector<3x512xf32>, vector<6x512xf32> -> vector<6x512xf32>
    %13 = arith.addf %8, %12 : vector<6x512xf32>
    %c495_i32 = arith.constant 495 : i32
    %14 = tpu.dynamic_rotate %0 by %c495_i32 dim 1 : vector<3x512xf32>, i32 -> vector<3x512xf32>
    %c3 = arith.constant 3 : index
    %c0_10 = arith.constant 0 : index
    %c0_11 = arith.constant 0 : index
    %15 = vector.load %arg1[%c3, %c0_10, %c0_11] : memref<4x6x3xf32, #tpu.memory_space<vmem>>, vector<1x6x3xf32>
    %16 = vector.shape_cast %15 : vector<1x6x3xf32> to vector<6x3xf32>
    %cst_12 = arith.constant dense<0.000000e+00> : vector<6x512xf32>
    %17 = tpu.matmul %16, %14, %cst_12 {dimension_numbers = #tpu.dot_dimension_numbers<[1], [0], [0], [1], [0, 0, 1, 1], [], []>} : vector<6x3xf32>, vector<3x512xf32>, vector<6x512xf32> -> vector<6x512xf32>
    %18 = arith.addf %13, %17 : vector<6x512xf32>
    %c0_13 = arith.constant 0 : index
    %c0_14 = arith.constant 0 : index
    %19 = vector.load %arg2[%c0_13, %c0_14] : memref<6x1xf32, #tpu.memory_space<vmem>>, vector<6x1xf32>
    %20 = vector.broadcast %19 : vector<6x1xf32> to vector<6x512xf32>
    %21 = arith.addf %18, %20 : vector<6x512xf32>
    %cst_15 = arith.constant 0.000000e+00 : f32
    %22 = vector.broadcast %cst_15 : f32 to vector<6x512xf32>
    %23 = arith.maximumf %21, %22 : vector<6x512xf32>
    %c511_i32_16 = arith.constant 511 : i32
    %24 = tpu.dynamic_rotate %23 by %c511_i32_16 dim 1 : vector<6x512xf32>, i32 -> vector<6x512xf32>
    %25 = arith.maximumf %23, %24 : vector<6x512xf32>
    %c496_i32_17 = arith.constant 496 : i32
    %26 = tpu.dynamic_rotate %23 by %c496_i32_17 dim 1 : vector<6x512xf32>, i32 -> vector<6x512xf32>
    %27 = arith.maximumf %25, %26 : vector<6x512xf32>
    %c495_i32_18 = arith.constant 495 : i32
    %28 = tpu.dynamic_rotate %23 by %c495_i32_18 dim 1 : vector<6x512xf32>, i32 -> vector<6x512xf32>
    %29 = arith.maximumf %27, %28 : vector<6x512xf32>
    %c0_19 = arith.constant 0 : index
    %c0_20 = arith.constant 0 : index
    %c0_21 = arith.constant 0 : index
    %30 = vector.load %arg3[%c0_19, %c0_20, %c0_21] : memref<4x16x6xf32, #tpu.memory_space<vmem>>, vector<1x16x6xf32>
    %31 = vector.shape_cast %30 : vector<1x16x6xf32> to vector<16x6xf32>
    %cst_22 = arith.constant dense<0.000000e+00> : vector<16x512xf32>
    %32 = tpu.matmul %31, %29, %cst_22 {dimension_numbers = #tpu.dot_dimension_numbers<[1], [0], [0], [1], [0, 0, 1, 1], [], []>} : vector<16x6xf32>, vector<6x512xf32>, vector<16x512xf32> -> vector<16x512xf32>
    %c510_i32 = arith.constant 510 : i32
    %33 = tpu.dynamic_rotate %29 by %c510_i32 dim 1 : vector<6x512xf32>, i32 -> vector<6x512xf32>
    %c1_23 = arith.constant 1 : index
    %c0_24 = arith.constant 0 : index
    %c0_25 = arith.constant 0 : index
    %34 = vector.load %arg3[%c1_23, %c0_24, %c0_25] : memref<4x16x6xf32, #tpu.memory_space<vmem>>, vector<1x16x6xf32>
    %35 = vector.shape_cast %34 : vector<1x16x6xf32> to vector<16x6xf32>
    %cst_26 = arith.constant dense<0.000000e+00> : vector<16x512xf32>
    %36 = tpu.matmul %35, %33, %cst_26 {dimension_numbers = #tpu.dot_dimension_numbers<[1], [0], [0], [1], [0, 0, 1, 1], [], []>} : vector<16x6xf32>, vector<6x512xf32>, vector<16x512xf32> -> vector<16x512xf32>
    %37 = arith.addf %32, %36 : vector<16x512xf32>
    %c480_i32 = arith.constant 480 : i32
    %38 = tpu.dynamic_rotate %29 by %c480_i32 dim 1 : vector<6x512xf32>, i32 -> vector<6x512xf32>
    %c2_27 = arith.constant 2 : index
    %c0_28 = arith.constant 0 : index
    %c0_29 = arith.constant 0 : index
    %39 = vector.load %arg3[%c2_27, %c0_28, %c0_29] : memref<4x16x6xf32, #tpu.memory_space<vmem>>, vector<1x16x6xf32>
    %40 = vector.shape_cast %39 : vector<1x16x6xf32> to vector<16x6xf32>
    %cst_30 = arith.constant dense<0.000000e+00> : vector<16x512xf32>
    %41 = tpu.matmul %40, %38, %cst_30 {dimension_numbers = #tpu.dot_dimension_numbers<[1], [0], [0], [1], [0, 0, 1, 1], [], []>} : vector<16x6xf32>, vector<6x512xf32>, vector<16x512xf32> -> vector<16x512xf32>
    %42 = arith.addf %37, %41 : vector<16x512xf32>
    %c478_i32 = arith.constant 478 : i32
    %43 = tpu.dynamic_rotate %29 by %c478_i32 dim 1 : vector<6x512xf32>, i32 -> vector<6x512xf32>
    %c3_31 = arith.constant 3 : index
    %c0_32 = arith.constant 0 : index
    %c0_33 = arith.constant 0 : index
    %44 = vector.load %arg3[%c3_31, %c0_32, %c0_33] : memref<4x16x6xf32, #tpu.memory_space<vmem>>, vector<1x16x6xf32>
    %45 = vector.shape_cast %44 : vector<1x16x6xf32> to vector<16x6xf32>
    %cst_34 = arith.constant dense<0.000000e+00> : vector<16x512xf32>
    %46 = tpu.matmul %45, %43, %cst_34 {dimension_numbers = #tpu.dot_dimension_numbers<[1], [0], [0], [1], [0, 0, 1, 1], [], []>} : vector<16x6xf32>, vector<6x512xf32>, vector<16x512xf32> -> vector<16x512xf32>
    %47 = arith.addf %42, %46 : vector<16x512xf32>
    %c0_35 = arith.constant 0 : index
    %c0_36 = arith.constant 0 : index
    %48 = vector.load %arg4[%c0_35, %c0_36] : memref<16x1xf32, #tpu.memory_space<vmem>>, vector<16x1xf32>
    %49 = vector.broadcast %48 : vector<16x1xf32> to vector<16x512xf32>
    %50 = arith.addf %47, %49 : vector<16x512xf32>
    %cst_37 = arith.constant 0.000000e+00 : f32
    %51 = vector.broadcast %cst_37 : f32 to vector<16x512xf32>
    %52 = arith.maximumf %50, %51 : vector<16x512xf32>
    %c510_i32_38 = arith.constant 510 : i32
    %53 = tpu.dynamic_rotate %52 by %c510_i32_38 dim 1 : vector<16x512xf32>, i32 -> vector<16x512xf32>
    %54 = arith.maximumf %52, %53 : vector<16x512xf32>
    %c480_i32_39 = arith.constant 480 : i32
    %55 = tpu.dynamic_rotate %52 by %c480_i32_39 dim 1 : vector<16x512xf32>, i32 -> vector<16x512xf32>
    %56 = arith.maximumf %54, %55 : vector<16x512xf32>
    %c478_i32_40 = arith.constant 478 : i32
    %57 = tpu.dynamic_rotate %52 by %c478_i32_40 dim 1 : vector<16x512xf32>, i32 -> vector<16x512xf32>
    %58 = arith.maximumf %56, %57 : vector<16x512xf32>
    %c0_41 = arith.constant 0 : index
    %c0_42 = arith.constant 0 : index
    %59 = vector.load %arg5[%c0_41, %c0_42] : memref<512x288xf32, #tpu.memory_space<vmem>>, vector<512x288xf32>
    %cst_43 = arith.constant dense<0.000000e+00> : vector<16x288xf32>
    %60 = tpu.matmul %58, %59, %cst_43 {dimension_numbers = #tpu.dot_dimension_numbers<[1], [0], [0], [1], [0, 0, 1, 1], [], []>} : vector<16x512xf32>, vector<512x288xf32>, vector<16x288xf32> -> vector<16x288xf32>
    %c0_44 = arith.constant 0 : index
    %c0_45 = arith.constant 0 : index
    %61 = vector.load %arg6[%c0_44, %c0_45] : memref<16x288xf32, #tpu.memory_space<vmem>>, vector<16x288xf32>
    %62 = arith.mulf %60, %61 : vector<16x288xf32>
    %cst_46 = arith.constant dense<0.000000e+00> : vector<288xf32>
    %63 = vector.multi_reduction <add>, %62, %cst_46 [0] : vector<16x288xf32> to vector<288xf32>
    %64 = vector.shape_cast %63 : vector<288xf32> to vector<1x288xf32>
    %65 = vector.extract_strided_slice %64 {offsets = [0, 0], sizes = [1, 144], strides = [1, 1]} : vector<1x288xf32> to vector<1x144xf32>
    %66 = vector.extract_strided_slice %64 {offsets = [0, 144], sizes = [1, 144], strides = [1, 1]} : vector<1x288xf32> to vector<1x144xf32>
    %67 = tpu.concatenate %65, %66 in 0 : vector<1x144xf32>, vector<1x144xf32> -> vector<2x144xf32>
    %c0_47 = arith.constant 0 : index
    %c0_48 = arith.constant 0 : index
    %68 = vector.load %arg7[%c0_47, %c0_48] : memref<144x64xf32, #tpu.memory_space<vmem>>, vector<144x64xf32>
    %cst_49 = arith.constant dense<0.000000e+00> : vector<2x64xf32>
    %69 = tpu.matmul %67, %68, %cst_49 {dimension_numbers = #tpu.dot_dimension_numbers<[1], [0], [0], [1], [0, 0, 1, 1], [], []>} : vector<2x144xf32>, vector<144x64xf32>, vector<2x64xf32> -> vector<2x64xf32>
    %c0_50 = arith.constant 0 : index
    %c0_51 = arith.constant 0 : index
    %70 = vector.load %arg8[%c0_50, %c0_51] : memref<1x64xf32, #tpu.memory_space<vmem>>, vector<1x64xf32>
    %71 = vector.broadcast %70 : vector<1x64xf32> to vector<2x64xf32>
    %72 = arith.addf %69, %71 : vector<2x64xf32>
    %cst_52 = arith.constant 0.000000e+00 : f32
    %73 = vector.broadcast %cst_52 : f32 to vector<2x64xf32>
    %74 = arith.maximumf %72, %73 : vector<2x64xf32>
    %c0_53 = arith.constant 0 : index
    %c0_54 = arith.constant 0 : index
    %75 = vector.load %arg9[%c0_53, %c0_54] : memref<64x32xf32, #tpu.memory_space<vmem>>, vector<64x32xf32>
    %cst_55 = arith.constant dense<0.000000e+00> : vector<2x32xf32>
    %76 = tpu.matmul %74, %75, %cst_55 {dimension_numbers = #tpu.dot_dimension_numbers<[1], [0], [0], [1], [0, 0, 1, 1], [], []>} : vector<2x64xf32>, vector<64x32xf32>, vector<2x32xf32> -> vector<2x32xf32>
    %c0_56 = arith.constant 0 : index
    %c0_57 = arith.constant 0 : index
    %77 = vector.load %arg10[%c0_56, %c0_57] : memref<1x32xf32, #tpu.memory_space<vmem>>, vector<1x32xf32>
    %78 = vector.broadcast %77 : vector<1x32xf32> to vector<2x32xf32>
    %79 = arith.addf %76, %78 : vector<2x32xf32>
    %cst_58 = arith.constant 0.000000e+00 : f32
    %80 = vector.broadcast %cst_58 : f32 to vector<2x32xf32>
    %81 = arith.maximumf %79, %80 : vector<2x32xf32>
    %c0_59 = arith.constant 0 : index
    %c0_60 = arith.constant 0 : index
    %82 = vector.load %arg11[%c0_59, %c0_60] : memref<32x10xf32, #tpu.memory_space<vmem>>, vector<32x10xf32>
    %cst_61 = arith.constant dense<0.000000e+00> : vector<2x10xf32>
    %83 = tpu.matmul %81, %82, %cst_61 {dimension_numbers = #tpu.dot_dimension_numbers<[1], [0], [0], [1], [0, 0, 1, 1], [], []>} : vector<2x32xf32>, vector<32x10xf32>, vector<2x10xf32> -> vector<2x10xf32>
    %c0_62 = arith.constant 0 : index
    %c0_63 = arith.constant 0 : index
    %84 = vector.load %arg12[%c0_62, %c0_63] : memref<1x10xf32, #tpu.memory_space<vmem>>, vector<1x10xf32>
    %85 = vector.broadcast %84 : vector<1x10xf32> to vector<2x10xf32>
    %86 = arith.addf %83, %85 : vector<2x10xf32>
    %c0_64 = arith.constant 0 : index
    %c0_65 = arith.constant 0 : index
    %87 = vector.load %arg13[%c0_64, %c0_65] : memref<2x10xf32, #tpu.memory_space<vmem>>, vector<2x10xf32>
    tpu.vector_store %arg13[%c0_64, %c0_65], %86 {strides = array<i32>} : memref<2x10xf32, #tpu.memory_space<vmem>>, vector<2x10xf32>,
    return
  }
}

</mosaic_0001>

<llo_original>
// kernel: vanilla_cnn_forward.1
$region0: #{vanilla_cnn_forward.1}
  #allocation0 [shape = 'u32[]', space=smem, size = 0x4, offset = 0x4, fixed_abs, tag = 'smem constant byte address 0x4 - core index']
  #allocation1 [shape = 'u32[72,128]{1,0:T(1,128)}', space=vmem, size = 0x9000, scoped, tag = 'internal scratch']
  %s0 = inlined_call_operand.vmem [shape: f32[3,512], index: 0, kind: input, shape index: {}]
  %s1 = inlined_call_operand.vmem [shape: f32[4,6,3], index: 1, kind: input, shape index: {}]
  %s2 = inlined_call_operand.vmem [shape: f32[6,1], index: 2, kind: input, shape index: {}]
  %s3 = inlined_call_operand.vmem [shape: f32[4,16,6], index: 3, kind: input, shape index: {}]
  %s4 = inlined_call_operand.vmem [shape: f32[16,1], index: 4, kind: input, shape index: {}]
  %s5 = inlined_call_operand.hbm [shape: f32[512,288], index: 5, kind: input, shape index: {}]
  %s6 = inlined_call_operand.vmem [shape: f32[16,288], index: 6, kind: input, shape index: {}]
  %s7 = inlined_call_operand.vmem [shape: f32[144,64], index: 7, kind: input, shape index: {}]
  %s8 = inlined_call_operand.vmem [shape: f32[1,64], index: 8, kind: input, shape index: {}]
  %s9 = inlined_call_operand.vmem [shape: f32[64,32], index: 9, kind: input, shape index: {}]
  %s10 = inlined_call_operand.vmem [shape: f32[1,32], index: 10, kind: input, shape index: {}]
  %s11 = inlined_call_operand.vmem [shape: f32[32,10], index: 11, kind: input, shape index: {}]
  %s12 = inlined_call_operand.vmem [shape: f32[1,10], index: 12, kind: input, shape index: {}]
  %s13 = inlined_call_operand.hbm [shape: f32[2,10], index: 13, kind: output, shape index: {}]
  %s14 = sld [smem:[#allocation0]]
  $region66: #{vanilla_cnn_forward.1} parent=0
    _
  %s16 = ssub.s32 1, %s14
  %s17 = scalar_select 0, %s16, %s14
  $region1: #{vanilla_cnn_forward.1} parent=0
    #allocation2 [shape = 'u8[786432]{0}', space=vmem, size = 0xc0000, scoped, tag = 'input window, operand 5, single buffered']
    #allocation3 [shape = 's32[1]{0}', space=sflag, size = 0x4, scoped, tag = 'scoped memory for vanilla_cnn_forward.1']
    #allocation4 [shape = 's32[1]{0}', space=sflag, size = 0x4, scoped, tag = 'scoped memory for vanilla_cnn_forward.1']
    #allocation5 [shape = 'u8[1024]{0}', space=vmem, size = 0x400, scoped, tag = 'output window, operand 0, single buffered']
    %18 = vsyncpa [#allocation3], 0
    %19 = vsyncpa [#allocation4], 0
    // Predicated region
    $region2: #{vanilla_cnn_forward.1} parent=1 // pred_check
      _
    $region3: #{vanilla_cnn_forward.1} parent=1 // pred_check_branch
      %21 = sbr.rel (0) target = $region5
    $region4: #{vanilla_cnn_forward.1} parent=1 // pred_region
      _
    $region5: #{vanilla_cnn_forward.1} parent=1 // pred_fallthru
      _
    // Predicated region
    $region6: #{vanilla_cnn_forward.1} parent=1 // pred_check
      _
    $region7: #{vanilla_cnn_forward.1} parent=1 // pred_check_branch
      %23 = sbr.rel (0) target = $region9
    $region8: #{vanilla_cnn_forward.1} parent=1 // pred_region
      _
    $region9: #{vanilla_cnn_forward.1} parent=1 // pred_fallthru
      _
    // Predicated region
    $region10: #{vanilla_cnn_forward.1} parent=1 // pred_check
      _
    $region11: #{vanilla_cnn_forward.1} parent=1 // pred_check_branch
      %25 = sbr.rel (0) target = $region13
    $region12: #{vanilla_cnn_forward.1} parent=1 // pred_region
      _
    $region13: #{vanilla_cnn_forward.1} parent=1 // pred_fallthru
      _
    // Predicated region
    $region14: #{vanilla_cnn_forward.1} parent=1 // pred_check
      _
    $region15: #{vanilla_cnn_forward.1} parent=1 // pred_check_branch
      %27 = sbr.rel (0) target = $region17
    $region16: #{vanilla_cnn_forward.1} parent=1 // pred_region
      _
    $region17: #{vanilla_cnn_forward.1} parent=1 // pred_fallthru
      _
    // Predicated region
    $region18: #{vanilla_cnn_forward.1} parent=1 // pred_check
      _
    $region19: #{vanilla_cnn_forward.1} parent=1 // pred_check_branch
      %29 = sbr.rel (0) target = $region21
    $region20: #{vanilla_cnn_forward.1} parent=1 // pred_region
      _
    $region21: #{vanilla_cnn_forward.1} parent=1 // pred_fallthru
      _
    // Predicated region
    $region22: #{vanilla_cnn_forward.1} parent=1 // pred_check
      _
    $region23: #{vanilla_cnn_forward.1} parent=1 // pred_check_branch
      %31 = sbr.rel (0) target = $region25
    $region24: #{vanilla_cnn_forward.1} parent=1 // pred_region
      %33 = vsyncadd [#allocation3], 0
      %s34 = sshll.u32 %s5, 4
      %s35 = int_to_ptr.hbm [resolvable:$true] %s34
      %s36 = sshll.u32 [#allocation2], 4
      %s37 = int_to_ptr.vmem [resolvable:$true] %s36
      %42 = dma.hbm_to_vmem [thread:$0]  %s35, 24576, %s37, [#allocation3], 384, 384, 24
    $region25: #{vanilla_cnn_forward.1} parent=1 // pred_fallthru
      _
    // Predicated region
    $region26: #{vanilla_cnn_forward.1} parent=1 // pred_check
      _
    $region27: #{vanilla_cnn_forward.1} parent=1 // pred_check_branch
      %44 = sbr.rel (0) target = $region29
    $region28: #{vanilla_cnn_forward.1} parent=1 // pred_region
      _
    $region29: #{vanilla_cnn_forward.1} parent=1 // pred_fallthru
      _
    // Predicated region
    $region30: #{vanilla_cnn_forward.1} parent=1 // pred_check
      _
    $region31: #{vanilla_cnn_forward.1} parent=1 // pred_check_branch
      %46 = sbr.rel (0) target = $region33
    $region32: #{vanilla_cnn_forward.1} parent=1 // pred_region
      _
    $region33: #{vanilla_cnn_forward.1} parent=1 // pred_fallthru
      _
    // Predicated region
    $region34: #{vanilla_cnn_forward.1} parent=1 // pred_check
      _
    $region35: #{vanilla_cnn_forward.1} parent=1 // pred_check_branch
      %48 = sbr.rel (0) target = $region37
    $region36: #{vanilla_cnn_forward.1} parent=1 // pred_region
      _
    $region37: #{vanilla_cnn_forward.1} parent=1 // pred_fallthru
      _
    // Predicated region
    $region38: #{vanilla_cnn_forward.1} parent=1 // pred_check
      _
    $region39: #{vanilla_cnn_forward.1} parent=1 // pred_check_branch
      %50 = sbr.rel (0) target = $region41
    $region40: #{vanilla_cnn_forward.1} parent=1 // pred_region
      _
    $region41: #{vanilla_cnn_forward.1} parent=1 // pred_fallthru
      _
    // Predicated region
    $region42: #{vanilla_cnn_forward.1} parent=1 // pred_check
      _
    $region43: #{vanilla_cnn_forward.1} parent=1 // pred_check_branch
      %52 = sbr.rel (0) target = $region45
    $region44: #{vanilla_cnn_forward.1} parent=1 // pred_region
      _
    $region45: #{vanilla_cnn_forward.1} parent=1 // pred_fallthru
      _
    // Predicated region
    $region46: #{vanilla_cnn_forward.1} parent=1 // pred_check
      _
    $region47: #{vanilla_cnn_forward.1} parent=1 // pred_check_branch
      %54 = sbr.rel (0) target = $region49
    $region48: #{vanilla_cnn_forward.1} parent=1 // pred_region
      _
    $region49: #{vanilla_cnn_forward.1} parent=1 // pred_fallthru
      _
    // Predicated region
    $region50: #{vanilla_cnn_forward.1} parent=1 // pred_check
      _
    $region51: #{vanilla_cnn_forward.1} parent=1 // pred_check_branch
      %56 = sbr.rel (0) target = $region53
    $region52: #{vanilla_cnn_forward.1} parent=1 // pred_region
      _
    $region53: #{vanilla_cnn_forward.1} parent=1 // pred_fallthru
      _
    // Predicated region
    $region54: #{vanilla_cnn_forward.1} parent=1 // pred_check
      _
    $region55: #{vanilla_cnn_forward.1} parent=1 // pred_check_branch
      %58 = sbr.rel (0) target = $region57
    $region56: #{vanilla_cnn_forward.1} parent=1 // pred_region
      %60 = dma.done [#allocation3], 24576
    $region57: #{vanilla_cnn_forward.1} parent=1 // pred_fallthru
      _
    %v61 = vld [vmem:[%s0] sm:$0x77]
    %v62 = vld [vmem:[%s0 + $0x8] sm:$0x77]
    %v63 = vld [vmem:[%s1] sm:$0x3f]
    %66 = vst [vmem:[#allocation1] ss:$2 sm:$0xff] %v61
    %s67 = scalar_lea.vmem [#allocation1], 16
    %68 = vst [vmem:[%s67] ss:$2 sm:$0xff] %v62
    %v69 = vld.sshfl [vmem:[#allocation1] sm:$0xff pattern:$0x75316420]
    %v70 = vld.sshfl [vmem:[#allocation1 + $0x8] sm:$0xff pattern:$0x75316420]
    %v71 = vld.sshfl [vmem:[#allocation1 + $0x10] sm:$0xff pattern:$0x75316420]
    %v72 = vld.sshfl [vmem:[#allocation1 + $0x18] sm:$0xff pattern:$0x75316420]
    %77 = vrot.lane.b32.xlu0 %v69, 127
    %v78 = vpop.permute.xlu0 %77
    %79 = vrot.lane.b32.xlu0 %v70, 127
    %v80 = vpop.permute.xlu0 %79
    %81 = vrot.lane.b32.xlu0 %v71, 127
    %v82 = vpop.permute.xlu0 %81
    %83 = vrot.lane.b32.xlu0 %v72, 127
    %v84 = vpop.permute.xlu0 %83
    %v85 = vlaneseq
    %v86 = vand.u32 %v85, 127
    %vm87 = vcmp.lt.s32.totalorder %v86, 127
    %v88 = vsel %vm87, %v82, %v84
    %v89 = vsel %vm87, %v80, %v82
    %v90 = vsel %vm87, %v78, %v80
    %v91 = vsel %vm87, %v84, %v78
    %s92 = scalar_lea.vmem %s1, 8
    %v93 = vld [vmem:[%s92] sm:$0x3f]
    %vm94 = vcmask 23552
    %v96 = vsel %vm94, %v93, 0
    %vm98 = vcmask 1042432
    %v100 = vsel %vm98, %v90, 0
    %v103 = vsel %vm98, %v89, 0
    %v106 = vsel %vm98, %v88, 0
    %v109 = vsel %vm98, %v91, 0
    %111 = vmatpush.msra.mxu0 0.0
    %112 = vmatpush.msra.mxu0 0.0
    %113 = vmatpush.msra.mxu0 0.0
    %114 = vmatpush.msra.mxu0 0.0
    %115 = vmatpush.msra.mxu0 0.0
    %116 = vmatpush.msra.mxu0 0.0
    %117 = vmatpush.msra.mxu0 0.0
    %118 = vmatpush.msra.mxu0 0.0
    %119 = vmatpush.msra.mxu0 0.0
    %120 = vmatpush.msra.mxu0 0.0
    %121 = vmatpush.msra.mxu0 0.0
    %122 = vmatpush.msra.mxu0 0.0
    %123 = vmatpush.msra.mxu0 0.0
    %124 = vmatpush.msra.mxu0 0.0
    %125 = vmatpush.msra.mxu0 0.0
    %126 = vmatpush.msra.mxu0 %v100
    %127 = vmatmul.f32.gmra.mxu0 %v96
    %v128 = vpop.f32.mrf.mxu0
    %v129 = vadd.f32 0.0, %v128
    %130 = vdwg.mxu0
    %131 = vmatpush.msra.mxu0 0.0
    %132 = vmatpush.msra.mxu0 0.0
    %133 = vmatpush.msra.mxu0 0.0
    %134 = vmatpush.msra.mxu0 0.0
    %135 = vmatpush.msra.mxu0 0.0
    %136 = vmatpush.msra.mxu0 0.0
    %137 = vmatpush.msra.mxu0 0.0
    %138 = vmatpush.msra.mxu0 0.0
    %139 = vmatpush.msra.mxu0 0.0
    %140 = vmatpush.msra.mxu0 0.0
    %141 = vmatpush.msra.mxu0 0.0
    %142 = vmatpush.msra.mxu0 0.0
    %143 = vmatpush.msra.mxu0 0.0
    %144 = vmatpush.msra.mxu0 0.0
    %145 = vmatpush.msra.mxu0 0.0
    %146 = vmatpush.msra.mxu0 %v103
    %147 = vmatmul.f32.gmra.mxu0 %v96
    %v148 = vpop.f32.mrf.mxu0
    %v149 = vadd.f32 0.0, %v148
    %150 = vdwg.mxu0
    %151 = vmatpush.msra.mxu0 0.0
    %152 = vmatpush.msra.mxu0 0.0
    %153 = vmatpush.msra.mxu0 0.0
    %154 = vmatpush.msra.mxu0 0.0
    %155 = vmatpush.msra.mxu0 0.0
    %156 = vmatpush.msra.mxu0 0.0
    %157 = vmatpush.msra.mxu0 0.0
    %158 = vmatpush.msra.mxu0 0.0
    %159 = vmatpush.msra.mxu0 0.0
    %160 = vmatpush.msra.mxu0 0.0
    %161 = vmatpush.msra.mxu0 0.0
    %162 = vmatpush.msra.mxu0 0.0
    %163 = vmatpush.msra.mxu0 0.0
    %164 = vmatpush.msra.mxu0 0.0
    %165 = vmatpush.msra.mxu0 0.0
    %166 = vmatpush.msra.mxu0 %v106
    %167 = vmatmul.f32.gmra.mxu0 %v96
    %v168 = vpop.f32.mrf.mxu0
    %v169 = vadd.f32 0.0, %v168
    %170 = vdwg.mxu0
    %171 = vmatpush.msra.mxu0 0.0
    %172 = vmatpush.msra.mxu0 0.0
    %173 = vmatpush.msra.mxu0 0.0
    %174 = vmatpush.msra.mxu0 0.0
    %175 = vmatpush.msra.mxu0 0.0
    %176 = vmatpush.msra.mxu0 0.0
    %177 = vmatpush.msra.mxu0 0.0
    %178 = vmatpush.msra.mxu0 0.0
    %179 = vmatpush.msra.mxu0 0.0
    %180 = vmatpush.msra.mxu0 0.0
    %181 = vmatpush.msra.mxu0 0.0
    %182 = vmatpush.msra.mxu0 0.0
    %183 = vmatpush.msra.mxu0 0.0
    %184 = vmatpush.msra.mxu0 0.0
    %185 = vmatpush.msra.mxu0 0.0
    %186 = vmatpush.msra.mxu0 %v109
    %187 = vmatmul.f32.gmra.mxu0 %v96
    %v188 = vpop.f32.mrf.mxu0
    %v189 = vadd.f32 0.0, %v188
    %190 = vdwg.mxu0
    %191 = vst [vmem:[#allocation1] ss:$2 sm:$0xff] %v61
    %s192 = scalar_lea.vmem [#allocation1], 16
    %193 = vst [vmem:[%s192] ss:$2 sm:$0xff] %v62
    %v194 = vld.sshfl [vmem:[#allocation1] sm:$0xff pattern:$0x75316420]
    %v195 = vld.sshfl [vmem:[#allocation1 + $0x8] sm:$0xff pattern:$0x75316420]
    %v196 = vld.sshfl [vmem:[#allocation1 + $0x10] sm:$0xff pattern:$0x75316420]
    %v197 = vld.sshfl [vmem:[#allocation1 + $0x18] sm:$0xff pattern:$0x75316420]
    %v199 = vsel %vm94, %v63, 0
    %v201 = vsel %vm98, %v194, 0
    %v203 = vsel %vm98, %v195, 0
    %v205 = vsel %vm98, %v196, 0
    %v207 = vsel %vm98, %v197, 0
    %209 = vmatpush.msra.mxu0 0.0
    %210 = vmatpush.msra.mxu0 0.0
    %211 = vmatpush.msra.mxu0 0.0
    %212 = vmatpush.msra.mxu0 0.0
    %213 = vmatpush.msra.mxu0 0.0
    %214 = vmatpush.msra.mxu0 0.0
    %215 = vmatpush.msra.mxu0 0.0
    %216 = vmatpush.msra.mxu0 0.0
    %217 = vmatpush.msra.mxu0 0.0
    %218 = vmatpush.msra.mxu0 0.0
    %219 = vmatpush.msra.mxu0 0.0
    %220 = vmatpush.msra.mxu0 0.0
    %221 = vmatpush.msra.mxu0 0.0
    %222 = vmatpush.msra.mxu0 0.0
    %223 = vmatpush.msra.mxu0 0.0
    %224 = vmatpush.msra.mxu0 %v201
    %225 = vmatmul.f32.gmra.mxu0 %v199
    %v226 = vpop.f32.mrf.mxu0
    %v227 = vadd.f32 %v129, %v226
    %228 = vdwg.mxu0
    %229 = vmatpush.msra.mxu0 0.0
    %230 = vmatpush.msra.mxu0 0.0
    %231 = vmatpush.msra.mxu0 0.0
    %232 = vmatpush.msra.mxu0 0.0
    %233 = vmatpush.msra.mxu0 0.0
    %234 = vmatpush.msra.mxu0 0.0
    %235 = vmatpush.msra.mxu0 0.0
    %236 = vmatpush.msra.mxu0 0.0
    %237 = vmatpush.msra.mxu0 0.0
    %238 = vmatpush.msra.mxu0 0.0
    %239 = vmatpush.msra.mxu0 0.0
    %240 = vmatpush.msra.mxu0 0.0
    %241 = vmatpush.msra.mxu0 0.0
    %242 = vmatpush.msra.mxu0 0.0
    %243 = vmatpush.msra.mxu0 0.0
    %244 = vmatpush.msra.mxu0 %v203
    %245 = vmatmul.f32.gmra.mxu0 %v199
    %v246 = vpop.f32.mrf.mxu0
    %v247 = vadd.f32 %v149, %v246
    %248 = vdwg.mxu0
    %249 = vmatpush.msra.mxu0 0.0
    %250 = vmatpush.msra.mxu0 0.0
    %251 = vmatpush.msra.mxu0 0.0
    %252 = vmatpush.msra.mxu0 0.0
    %253 = vmatpush.msra.mxu0 0.0
    %254 = vmatpush.msra.mxu0 0.0
    %255 = vmatpush.msra.mxu0 0.0
    %256 = vmatpush.msra.mxu0 0.0
    %257 = vmatpush.msra.mxu0 0.0
    %258 = vmatpush.msra.mxu0 0.0
    %259 = vmatpush.msra.mxu0 0.0
    %260 = vmatpush.msra.mxu0 0.0
    %261 = vmatpush.msra.mxu0 0.0
    %262 = vmatpush.msra.mxu0 0.0
    %263 = vmatpush.msra.mxu0 0.0
    %264 = vmatpush.msra.mxu0 %v205
    %265 = vmatmul.f32.gmra.mxu0 %v199
    %v266 = vpop.f32.mrf.mxu0
    %v267 = vadd.f32 %v169, %v266
    %268 = vdwg.mxu0
    %269 = vmatpush.msra.mxu0 0.0
    %270 = vmatpush.msra.mxu0 0.0
    %271 = vmatpush.msra.mxu0 0.0
    %272 = vmatpush.msra.mxu0 0.0
    %273 = vmatpush.msra.mxu0 0.0
    %274 = vmatpush.msra.mxu0 0.0
    %275 = vmatpush.msra.mxu0 0.0
    %276 = vmatpush.msra.mxu0 0.0
    %277 = vmatpush.msra.mxu0 0.0
    %278 = vmatpush.msra.mxu0 0.0
    %279 = vmatpush.msra.mxu0 0.0
    %280 = vmatpush.msra.mxu0 0.0
    %281 = vmatpush.msra.mxu0 0.0
    %282 = vmatpush.msra.mxu0 0.0
    %283 = vmatpush.msra.mxu0 0.0
    %284 = vmatpush.msra.mxu0 %v207
    %285 = vmatmul.f32.gmra.mxu0 %v199
    %v286 = vpop.f32.mrf.mxu0
    %v287 = vadd.f32 %v189, %v286
    %288 = vdwg.mxu0
    %289 = vst [vmem:[#allocation1] ss:$2 sm:$0xff] %v61
    %s290 = scalar_lea.vmem [#allocation1], 16
    %291 = vst [vmem:[%s290] ss:$2 sm:$0xff] %v62
    %v292 = vld.sshfl [vmem:[#allocation1] sm:$0xff pattern:$0x75316420]
    %v293 = vld.sshfl [vmem:[#allocation1 + $0x8] sm:$0xff pattern:$0x75316420]
    %v294 = vld.sshfl [vmem:[#allocation1 + $0x10] sm:$0xff pattern:$0x75316420]
    %v295 = vld.sshfl [vmem:[#allocation1 + $0x18] sm:$0xff pattern:$0x75316420]
    %300 = vrot.lane.b32.xlu0 %v292, 112
    %v301 = vpop.permute.xlu0 %300
    %302 = vrot.lane.b32.xlu0 %v293, 112
    %v303 = vpop.permute.xlu0 %302
    %304 = vrot.lane.b32.xlu0 %v294, 112
    %v305 = vpop.permute.xlu0 %304
    %306 = vrot.lane.b32.xlu0 %v295, 112
    %v307 = vpop.permute.xlu0 %306
    %vm308 = vcmp.lt.s32.totalorder %v86, 112
    %v309 = vsel %vm308, %v305, %v307
    %v310 = vsel %vm308, %v303, %v305
    %v311 = vsel %vm308, %v301, %v303
    %v312 = vsel %vm308, %v307, %v301
    %s313 = scalar_lea.vmem %s1, 16
    %v314 = vld [vmem:[%s313] sm:$0x3f]
    %v316 = vsel %vm94, %v314, 0
    %v319 = vsel %vm98, %v311, 0
    %v322 = vsel %vm98, %v310, 0
    %v325 = vsel %vm98, %v309, 0
    %v328 = vsel %vm98, %v312, 0
    %330 = vmatpush.msra.mxu0 0.0
    %331 = vmatpush.msra.mxu0 0.0
    %332 = vmatpush.msra.mxu0 0.0
    %333 = vmatpush.msra.mxu0 0.0
    %334 = vmatpush.msra.mxu0 0.0
    %335 = vmatpush.msra.mxu0 0.0
    %336 = vmatpush.msra.mxu0 0.0
    %337 = vmatpush.msra.mxu0 0.0
    %338 = vmatpush.msra.mxu0 0.0
    %339 = vmatpush.msra.mxu0 0.0
    %340 = vmatpush.msra.mxu0 0.0
    %341 = vmatpush.msra.mxu0 0.0
    %342 = vmatpush.msra.mxu0 0.0
    %343 = vmatpush.msra.mxu0 0.0
    %344 = vmatpush.msra.mxu0 0.0
    %345 = vmatpush.msra.mxu0 %v319
    %346 = vmatmul.f32.gmra.mxu0 %v316
    %v347 = vpop.f32.mrf.mxu0
    %v348 = vadd.f32 0.0, %v347
    %349 = vdwg.mxu0
    %350 = vmatpush.msra.mxu0 0.0
    %351 = vmatpush.msra.mxu0 0.0
    %352 = vmatpush.msra.mxu0 0.0
    %353 = vmatpush.msra.mxu0 0.0
    %354 = vmatpush.msra.mxu0 0.0
    %355 = vmatpush.msra.mxu0 0.0
    %356 = vmatpush.msra.mxu0 0.0
    %357 = vmatpush.msra.mxu0 0.0
    %358 = vmatpush.msra.mxu0 0.0
    %359 = vmatpush.msra.mxu0 0.0
    %360 = vmatpush.msra.mxu0 0.0
    %361 = vmatpush.msra.mxu0 0.0
    %362 = vmatpush.msra.mxu0 0.0
    %363 = vmatpush.msra.mxu0 0.0
    %364 = vmatpush.msra.mxu0 0.0
    %365 = vmatpush.msra.mxu0 %v322
    %366 = vmatmul.f32.gmra.mxu0 %v316
    %v367 = vpop.f32.mrf.mxu0
    %v368 = vadd.f32 0.0, %v367
    %369 = vdwg.mxu0
    %370 = vmatpush.msra.mxu0 0.0
    %371 = vmatpush.msra.mxu0 0.0
    %372 = vmatpush.msra.mxu0 0.0
    %373 = vmatpush.msra.mxu0 0.0
    %374 = vmatpush.msra.mxu0 0.0
    %375 = vmatpush.msra.mxu0 0.0
    %376 = vmatpush.msra.mxu0 0.0
    %377 = vmatpush.msra.mxu0 0.0
    %378 = vmatpush.msra.mxu0 0.0
    %379 = vmatpush.msra.mxu0 0.0
    %380 = vmatpush.msra.mxu0 0.0
    %381 = vmatpush.msra.mxu0 0.0
    %382 = vmatpush.msra.mxu0 0.0
    %383 = vmatpush.msra.mxu0 0.0
    %384 = vmatpush.msra.mxu0 0.0
    %385 = vmatpush.msra.mxu0 %v325
    %386 = vmatmul.f32.gmra.mxu0 %v316
    %v387 = vpop.f32.mrf.mxu0
    %v388 = vadd.f32 0.0, %v387
    %389 = vdwg.mxu0
    %390 = vmatpush.msra.mxu0 0.0
    %391 = vmatpush.msra.mxu0 0.0
    %392 = vmatpush.msra.mxu0 0.0
    %393 = vmatpush.msra.mxu0 0.0
    %394 = vmatpush.msra.mxu0 0.0
    %395 = vmatpush.msra.mxu0 0.0
    %396 = vmatpush.msra.mxu0 0.0
    %397 = vmatpush.msra.mxu0 0.0
    %398 = vmatpush.msra.mxu0 0.0
    %399 = vmatpush.msra.mxu0 0.0
    %400 = vmatpush.msra.mxu0 0.0
    %401 = vmatpush.msra.mxu0 0.0
    %402 = vmatpush.msra.mxu0 0.0
    %403 = vmatpush.msra.mxu0 0.0
    %404 = vmatpush.msra.mxu0 0.0
    %405 = vmatpush.msra.mxu0 %v328
    %406 = vmatmul.f32.gmra.mxu0 %v316
    %v407 = vpop.f32.mrf.mxu0
    %v408 = vadd.f32 0.0, %v407
    %409 = vdwg.mxu0
    %v410 = vadd.f32 %v227, %v348
    %v411 = vadd.f32 %v247, %v368
    %v412 = vadd.f32 %v267, %v388
    %v413 = vadd.f32 %v287, %v408
    %414 = vst [vmem:[#allocation1] ss:$2 sm:$0xff] %v61
    %s415 = scalar_lea.vmem [#allocation1], 16
    %416 = vst [vmem:[%s415] ss:$2 sm:$0xff] %v62
    %v417 = vld.sshfl [vmem:[#allocation1] sm:$0xff pattern:$0x75316420]
    %v418 = vld.sshfl [vmem:[#allocation1 + $0x8] sm:$0xff pattern:$0x75316420]
    %v419 = vld.sshfl [vmem:[#allocation1 + $0x10] sm:$0xff pattern:$0x75316420]
    %v420 = vld.sshfl [vmem:[#allocation1 + $0x18] sm:$0xff pattern:$0x75316420]
    %425 = vrot.lane.b32.xlu0 %v417, 111
    %v426 = vpop.permute.xlu0 %425
    %427 = vrot.lane.b32.xlu0 %v418, 111
    %v428 = vpop.permute.xlu0 %427
    %429 = vrot.lane.b32.xlu0 %v419, 111
    %v430 = vpop.permute.xlu0 %429
    %431 = vrot.lane.b32.xlu0 %v420, 111
    %v432 = vpop.permute.xlu0 %431
    %vm433 = vcmp.lt.s32.totalorder %v86, 111
    %v434 = vsel %vm433, %v430, %v432
    %v435 = vsel %vm433, %v428, %v430
    %v436 = vsel %vm433, %v426, %v428
    %v437 = vsel %vm433, %v432, %v426
    %s438 = scalar_lea.vmem %s1, 24
    %v439 = vld [vmem:[%s438] sm:$0x3f]
    %v441 = vsel %vm94, %v439, 0
    %v444 = vsel %vm98, %v436, 0
    %v447 = vsel %vm98, %v435, 0
    %v450 = vsel %vm98, %v434, 0
    %v453 = vsel %vm98, %v437, 0
    %455 = vmatpush.msra.mxu0 0.0
    %456 = vmatpush.msra.mxu0 0.0
    %457 = vmatpush.msra.mxu0 0.0
    %458 = vmatpush.msra.mxu0 0.0
    %459 = vmatpush.msra.mxu0 0.0
    %460 = vmatpush.msra.mxu0 0.0
    %461 = vmatpush.msra.mxu0 0.0
    %462 = vmatpush.msra.mxu0 0.0
    %463 = vmatpush.msra.mxu0 0.0
    %464 = vmatpush.msra.mxu0 0.0
    %465 = vmatpush.msra.mxu0 0.0
    %466 = vmatpush.msra.mxu0 0.0
    %467 = vmatpush.msra.mxu0 0.0
    %468 = vmatpush.msra.mxu0 0.0
    %469 = vmatpush.msra.mxu0 0.0
    %470 = vmatpush.msra.mxu0 %v444
    %471 = vmatmul.f32.gmra.mxu0 %v441
    %v472 = vpop.f32.mrf.mxu0
    %v473 = vadd.f32 0.0, %v472
    %474 = vdwg.mxu0
    %475 = vmatpush.msra.mxu0 0.0
    %476 = vmatpush.msra.mxu0 0.0
    %477 = vmatpush.msra.mxu0 0.0
    %478 = vmatpush.msra.mxu0 0.0
    %479 = vmatpush.msra.mxu0 0.0
    %480 = vmatpush.msra.mxu0 0.0
    %481 = vmatpush.msra.mxu0 0.0
    %482 = vmatpush.msra.mxu0 0.0
    %483 = vmatpush.msra.mxu0 0.0
    %484 = vmatpush.msra.mxu0 0.0
    %485 = vmatpush.msra.mxu0 0.0
    %486 = vmatpush.msra.mxu0 0.0
    %487 = vmatpush.msra.mxu0 0.0
    %488 = vmatpush.msra.mxu0 0.0
    %489 = vmatpush.msra.mxu0 0.0
    %490 = vmatpush.msra.mxu0 %v447
    %491 = vmatmul.f32.gmra.mxu0 %v441
    %v492 = vpop.f32.mrf.mxu0
    %v493 = vadd.f32 0.0, %v492
    %494 = vdwg.mxu0
    %495 = vmatpush.msra.mxu0 0.0
    %496 = vmatpush.msra.mxu0 0.0
    %497 = vmatpush.msra.mxu0 0.0
    %498 = vmatpush.msra.mxu0 0.0
    %499 = vmatpush.msra.mxu0 0.0
    %500 = vmatpush.msra.mxu0 0.0
    %501 = vmatpush.msra.mxu0 0.0
    %502 = vmatpush.msra.mxu0 0.0
    %503 = vmatpush.msra.mxu0 0.0
    %504 = vmatpush.msra.mxu0 0.0
    %505 = vmatpush.msra.mxu0 0.0
    %506 = vmatpush.msra.mxu0 0.0
    %507 = vmatpush.msra.mxu0 0.0
    %508 = vmatpush.msra.mxu0 0.0
    %509 = vmatpush.msra.mxu0 0.0
    %510 = vmatpush.msra.mxu0 %v450
    %511 = vmatmul.f32.gmra.mxu0 %v441
    %v512 = vpop.f32.mrf.mxu0
    %v513 = vadd.f32 0.0, %v512
    %514 = vdwg.mxu0
    %515 = vmatpush.msra.mxu0 0.0
    %516 = vmatpush.msra.mxu0 0.0
    %517 = vmatpush.msra.mxu0 0.0
    %518 = vmatpush.msra.mxu0 0.0
    %519 = vmatpush.msra.mxu0 0.0
    %520 = vmatpush.msra.mxu0 0.0
    %521 = vmatpush.msra.mxu0 0.0
    %522 = vmatpush.msra.mxu0 0.0
    %523 = vmatpush.msra.mxu0 0.0
    %524 = vmatpush.msra.mxu0 0.0
    %525 = vmatpush.msra.mxu0 0.0
    %526 = vmatpush.msra.mxu0 0.0
    %527 = vmatpush.msra.mxu0 0.0
    %528 = vmatpush.msra.mxu0 0.0
    %529 = vmatpush.msra.mxu0 0.0
    %530 = vmatpush.msra.mxu0 %v453
    %531 = vmatmul.f32.gmra.mxu0 %v441
    %v532 = vpop.f32.mrf.mxu0
    %v533 = vadd.f32 0.0, %v532
    %534 = vdwg.mxu0
    %v535 = vadd.f32 %v410, %v473
    %v536 = vadd.f32 %v411, %v493
    %v537 = vadd.f32 %v412, %v513
    %v538 = vadd.f32 %v413, %v533
    %v539 = vld [vmem:[%s2] sm:$0x3f]
    %541 = vset.pattern.permute.xlu0 0
    %542 = vperm.xlu0 %541, %v539
    %v543 = vpop.permute.xlu0 %542
    %v545 = vadd.f32 %v535, %v543
    %v546 = vadd.f32 %v536, %v543
    %v547 = vadd.f32 %v537, %v543
    %v548 = vadd.f32 %v538, %v543
    %v549 = vmax.f32 %v545, 0.0
    %v550 = vmax.f32 %v546, 0.0
    %v551 = vmax.f32 %v547, 0.0
    %v552 = vmax.f32 %v548, 0.0
    %553 = vrot.lane.b32.xlu0 %v549, 127
    %v554 = vpop.permute.xlu0 %553
    %555 = vrot.lane.b32.xlu0 %v550, 127
    %v556 = vpop.permute.xlu0 %555
    %557 = vrot.lane.b32.xlu0 %v551, 127
    %v558 = vpop.permute.xlu0 %557
    %559 = vrot.lane.b32.xlu0 %v552, 127
    %v560 = vpop.permute.xlu0 %559
    %v561 = vsel %vm87, %v558, %v560
    %v562 = vsel %vm87, %v556, %v558
    %v563 = vsel %vm87, %v554, %v556
    %v564 = vsel %vm87, %v560, %v554
    %v565 = vmax.f32 %v549, %v563
    %v566 = vmax.f32 %v550, %v562
    %v567 = vmax.f32 %v551, %v561
    %v568 = vmax.f32 %v552, %v564
    %569 = vrot.lane.b32.xlu0 %v549, 112
    %v570 = vpop.permute.xlu0 %569
    %571 = vrot.lane.b32.xlu0 %v550, 112
    %v572 = vpop.permute.xlu0 %571
    %573 = vrot.lane.b32.xlu0 %v551, 112
    %v574 = vpop.permute.xlu0 %573
    %575 = vrot.lane.b32.xlu0 %v552, 112
    %v576 = vpop.permute.xlu0 %575
    %v577 = vsel %vm308, %v574, %v576
    %v578 = vsel %vm308, %v572, %v574
    %v579 = vsel %vm308, %v570, %v572
    %v580 = vsel %vm308, %v576, %v570
    %v581 = vmax.f32 %v565, %v579
    %v582 = vmax.f32 %v566, %v578
    %v583 = vmax.f32 %v567, %v577
    %v584 = vmax.f32 %v568, %v580
    %585 = vrot.lane.b32.xlu0 %v549, 111
    %v586 = vpop.permute.xlu0 %585
    %587 = vrot.lane.b32.xlu0 %v550, 111
    %v588 = vpop.permute.xlu0 %587
    %589 = vrot.lane.b32.xlu0 %v551, 111
    %v590 = vpop.permute.xlu0 %589
    %591 = vrot.lane.b32.xlu0 %v552, 111
    %v592 = vpop.permute.xlu0 %591
    %v593 = vsel %vm433, %v590, %v592
    %v594 = vsel %vm433, %v588, %v590
    %v595 = vsel %vm433, %v586, %v588
    %v596 = vsel %vm433, %v592, %v586
    %v597 = vmax.f32 %v581, %v595
    %v598 = vmax.f32 %v582, %v594
    %v599 = vmax.f32 %v583, %v593
    %v600 = vmax.f32 %v584, %v596
    %v601 = vld [vmem:[%s3] sm:$0xff]
    %v602 = vld [vmem:[%s3 + $0x8] sm:$0xff]
    %603 = vrot.lane.b32.xlu0 %v597, 126
    %v604 = vpop.permute.xlu0 %603
    %605 = vrot.lane.b32.xlu0 %v598, 126
    %v606 = vpop.permute.xlu0 %605
    %607 = vrot.lane.b32.xlu0 %v599, 126
    %v608 = vpop.permute.xlu0 %607
    %609 = vrot.lane.b32.xlu0 %v600, 126
    %v610 = vpop.permute.xlu0 %609
    %vm611 = vcmp.lt.s32.totalorder %v86, 126
    %v612 = vsel %vm611, %v608, %v610
    %v613 = vsel %vm611, %v606, %v608
    %v614 = vsel %vm611, %v604, %v606
    %v615 = vsel %vm611, %v610, %v604
    %s616 = scalar_lea.vmem %s3, 16
    %v617 = vld [vmem:[%s616] sm:$0xff]
    %v618 = vld [vmem:[%s616 + $0x8] sm:$0xff]
    %vm619 = vcmask 48128
    %v621 = vsel %vm619, %v617, 0
    %v624 = vsel %vm619, %v618, 0
    %vm626 = vcmask 1045504
    %v628 = vsel %vm626, %v614, 0
    %v631 = vsel %vm626, %v613, 0
    %v634 = vsel %vm626, %v612, 0
    %v637 = vsel %vm626, %v615, 0
    %639 = vmatpush.msra.mxu0 0.0
    %640 = vmatpush.msra.mxu0 0.0
    %641 = vmatpush.msra.mxu0 0.0
    %642 = vmatpush.msra.mxu0 0.0
    %643 = vmatpush.msra.mxu0 0.0
    %644 = vmatpush.msra.mxu0 0.0
    %645 = vmatpush.msra.mxu0 0.0
    %646 = vmatpush.msra.mxu0 0.0
    %647 = vmatpush.msra.mxu0 0.0
    %648 = vmatpush.msra.mxu0 0.0
    %649 = vmatpush.msra.mxu0 0.0
    %650 = vmatpush.msra.mxu0 0.0
    %651 = vmatpush.msra.mxu0 0.0
    %652 = vmatpush.msra.mxu0 0.0
    %653 = vmatpush.msra.mxu0 0.0
    %654 = vmatpush.msra.mxu0 %v628
    %655 = vmatmul.f32.gmra.mxu0 %v621
    %v656 = vpop.f32.mrf.mxu0
    %v657 = vadd.f32 0.0, %v656
    %658 = vmatmul.f32.gmra.mxu0 %v624
    %v659 = vpop.f32.mrf.mxu0
    %v660 = vadd.f32 0.0, %v659
    %661 = vdwg.mxu0
    %662 = vmatpush.msra.mxu0 0.0
    %663 = vmatpush.msra.mxu0 0.0
    %664 = vmatpush.msra.mxu0 0.0
    %665 = vmatpush.msra.mxu0 0.0
    %666 = vmatpush.msra.mxu0 0.0
    %667 = vmatpush.msra.mxu0 0.0
    %668 = vmatpush.msra.mxu0 0.0
    %669 = vmatpush.msra.mxu0 0.0
    %670 = vmatpush.msra.mxu0 0.0
    %671 = vmatpush.msra.mxu0 0.0
    %672 = vmatpush.msra.mxu0 0.0
    %673 = vmatpush.msra.mxu0 0.0
    %674 = vmatpush.msra.mxu0 0.0
    %675 = vmatpush.msra.mxu0 0.0
    %676 = vmatpush.msra.mxu0 0.0
    %677 = vmatpush.msra.mxu0 %v631
    %678 = vmatmul.f32.gmra.mxu0 %v621
    %v679 = vpop.f32.mrf.mxu0
    %v680 = vadd.f32 0.0, %v679
    %681 = vmatmul.f32.gmra.mxu0 %v624
    %v682 = vpop.f32.mrf.mxu0
    %v683 = vadd.f32 0.0, %v682
    %684 = vdwg.mxu0
    %685 = vmatpush.msra.mxu0 0.0
    %686 = vmatpush.msra.mxu0 0.0
    %687 = vmatpush.msra.mxu0 0.0
    %688 = vmatpush.msra.mxu0 0.0
    %689 = vmatpush.msra.mxu0 0.0
    %690 = vmatpush.msra.mxu0 0.0
    %691 = vmatpush.msra.mxu0 0.0
    %692 = vmatpush.msra.mxu0 0.0
    %693 = vmatpush.msra.mxu0 0.0
    %694 = vmatpush.msra.mxu0 0.0
    %695 = vmatpush.msra.mxu0 0.0
    %696 = vmatpush.msra.mxu0 0.0
    %697 = vmatpush.msra.mxu0 0.0
    %698 = vmatpush.msra.mxu0 0.0
    %699 = vmatpush.msra.mxu0 0.0
    %700 = vmatpush.msra.mxu0 %v634
    %701 = vmatmul.f32.gmra.mxu0 %v621
    %v702 = vpop.f32.mrf.mxu0
    %v703 = vadd.f32 0.0, %v702
    %704 = vmatmul.f32.gmra.mxu0 %v624
    %v705 = vpop.f32.mrf.mxu0
    %v706 = vadd.f32 0.0, %v705
    %707 = vdwg.mxu0
    %708 = vmatpush.msra.mxu0 0.0
    %709 = vmatpush.msra.mxu0 0.0
    %710 = vmatpush.msra.mxu0 0.0
    %711 = vmatpush.msra.mxu0 0.0
    %712 = vmatpush.msra.mxu0 0.0
    %713 = vmatpush.msra.mxu0 0.0
    %714 = vmatpush.msra.mxu0 0.0
    %715 = vmatpush.msra.mxu0 0.0
    %716 = vmatpush.msra.mxu0 0.0
    %717 = vmatpush.msra.mxu0 0.0
    %718 = vmatpush.msra.mxu0 0.0
    %719 = vmatpush.msra.mxu0 0.0
    %720 = vmatpush.msra.mxu0 0.0
    %721 = vmatpush.msra.mxu0 0.0
    %722 = vmatpush.msra.mxu0 0.0
    %723 = vmatpush.msra.mxu0 %v637
    %724 = vmatmul.f32.gmra.mxu0 %v621
    %v725 = vpop.f32.mrf.mxu0
    %v726 = vadd.f32 0.0, %v725
    %727 = vmatmul.f32.gmra.mxu0 %v624
    %v728 = vpop.f32.mrf.mxu0
    %v729 = vadd.f32 0.0, %v728
    %730 = vdwg.mxu0
    %v732 = vsel %vm619, %v601, 0
    %v735 = vsel %vm619, %v602, 0
    %v738 = vsel %vm626, %v597, 0
    %v741 = vsel %vm626, %v598, 0
    %v744 = vsel %vm626, %v599, 0
    %v747 = vsel %vm626, %v600, 0
    %749 = vmatpush.msra.mxu0 0.0
    %750 = vmatpush.msra.mxu0 0.0
    %751 = vmatpush.msra.mxu0 0.0
    %752 = vmatpush.msra.mxu0 0.0
    %753 = vmatpush.msra.mxu0 0.0
    %754 = vmatpush.msra.mxu0 0.0
    %755 = vmatpush.msra.mxu0 0.0
    %756 = vmatpush.msra.mxu0 0.0
    %757 = vmatpush.msra.mxu0 0.0
    %758 = vmatpush.msra.mxu0 0.0
    %759 = vmatpush.msra.mxu0 0.0
    %760 = vmatpush.msra.mxu0 0.0
    %761 = vmatpush.msra.mxu0 0.0
    %762 = vmatpush.msra.mxu0 0.0
    %763 = vmatpush.msra.mxu0 0.0
    %764 = vmatpush.msra.mxu0 %v738
    %765 = vmatmul.f32.gmra.mxu0 %v732
    %v766 = vpop.f32.mrf.mxu0
    %v767 = vadd.f32 %v657, %v766
    %768 = vmatmul.f32.gmra.mxu0 %v735
    %v769 = vpop.f32.mrf.mxu0
    %v770 = vadd.f32 %v660, %v769
    %771 = vdwg.mxu0
    %772 = vmatpush.msra.mxu0 0.0
    %773 = vmatpush.msra.mxu0 0.0
    %774 = vmatpush.msra.mxu0 0.0
    %775 = vmatpush.msra.mxu0 0.0
    %776 = vmatpush.msra.mxu0 0.0
    %777 = vmatpush.msra.mxu0 0.0
    %778 = vmatpush.msra.mxu0 0.0
    %779 = vmatpush.msra.mxu0 0.0
    %780 = vmatpush.msra.mxu0 0.0
    %781 = vmatpush.msra.mxu0 0.0
    %782 = vmatpush.msra.mxu0 0.0
    %783 = vmatpush.msra.mxu0 0.0
    %784 = vmatpush.msra.mxu0 0.0
    %785 = vmatpush.msra.mxu0 0.0
    %786 = vmatpush.msra.mxu0 0.0
    %787 = vmatpush.msra.mxu0 %v741
    %788 = vmatmul.f32.gmra.mxu0 %v732
    %v789 = vpop.f32.mrf.mxu0
    %v790 = vadd.f32 %v680, %v789
    %791 = vmatmul.f32.gmra.mxu0 %v735
    %v792 = vpop.f32.mrf.mxu0
    %v793 = vadd.f32 %v683, %v792
    %794 = vdwg.mxu0
    %795 = vmatpush.msra.mxu0 0.0
    %796 = vmatpush.msra.mxu0 0.0
    %797 = vmatpush.msra.mxu0 0.0
    %798 = vmatpush.msra.mxu0 0.0
    %799 = vmatpush.msra.mxu0 0.0
    %800 = vmatpush.msra.mxu0 0.0
    %801 = vmatpush.msra.mxu0 0.0
    %802 = vmatpush.msra.mxu0 0.0
    %803 = vmatpush.msra.mxu0 0.0
    %804 = vmatpush.msra.mxu0 0.0
    %805 = vmatpush.msra.mxu0 0.0
    %806 = vmatpush.msra.mxu0 0.0
    %807 = vmatpush.msra.mxu0 0.0
    %808 = vmatpush.msra.mxu0 0.0
    %809 = vmatpush.msra.mxu0 0.0
    %810 = vmatpush.msra.mxu0 %v744
    %811 = vmatmul.f32.gmra.mxu0 %v732
    %v812 = vpop.f32.mrf.mxu0
    %v813 = vadd.f32 %v703, %v812
    %814 = vmatmul.f32.gmra.mxu0 %v735
    %v815 = vpop.f32.mrf.mxu0
    %v816 = vadd.f32 %v706, %v815
    %817 = vdwg.mxu0
    %818 = vmatpush.msra.mxu0 0.0
    %819 = vmatpush.msra.mxu0 0.0
    %820 = vmatpush.msra.mxu0 0.0
    %821 = vmatpush.msra.mxu0 0.0
    %822 = vmatpush.msra.mxu0 0.0
    %823 = vmatpush.msra.mxu0 0.0
    %824 = vmatpush.msra.mxu0 0.0
    %825 = vmatpush.msra.mxu0 0.0
    %826 = vmatpush.msra.mxu0 0.0
    %827 = vmatpush.msra.mxu0 0.0
    %828 = vmatpush.msra.mxu0 0.0
    %829 = vmatpush.msra.mxu0 0.0
    %830 = vmatpush.msra.mxu0 0.0
    %831 = vmatpush.msra.mxu0 0.0
    %832 = vmatpush.msra.mxu0 0.0
    %833 = vmatpush.msra.mxu0 %v747
    %834 = vmatmul.f32.gmra.mxu0 %v732
    %v835 = vpop.f32.mrf.mxu0
    %v836 = vadd.f32 %v726, %v835
    %837 = vmatmul.f32.gmra.mxu0 %v735
    %v838 = vpop.f32.mrf.mxu0
    %v839 = vadd.f32 %v729, %v838
    %840 = vdwg.mxu0
    %841 = vrot.lane.b32.xlu0 %v597, 96
    %v842 = vpop.permute.xlu0 %841
    %843 = vrot.lane.b32.xlu0 %v598, 96
    %v844 = vpop.permute.xlu0 %843
    %845 = vrot.lane.b32.xlu0 %v599, 96
    %v846 = vpop.permute.xlu0 %845
    %847 = vrot.lane.b32.xlu0 %v600, 96
    %v848 = vpop.permute.xlu0 %847
    %vm849 = vcmp.lt.s32.totalorder %v86, 96
    %v850 = vsel %vm849, %v846, %v848
    %v851 = vsel %vm849, %v844, %v846
    %v852 = vsel %vm849, %v842, %v844
    %v853 = vsel %vm849, %v848, %v842
    %s854 = scalar_lea.vmem %s3, 32
    %v855 = vld [vmem:[%s854] sm:$0xff]
    %v856 = vld [vmem:[%s854 + $0x8] sm:$0xff]
    %v858 = vsel %vm619, %v855, 0
    %v861 = vsel %vm619, %v856, 0
    %v864 = vsel %vm626, %v852, 0
    %v867 = vsel %vm626, %v851, 0
    %v870 = vsel %vm626, %v850, 0
    %v873 = vsel %vm626, %v853, 0
    %875 = vmatpush.msra.mxu0 0.0
    %876 = vmatpush.msra.mxu0 0.0
    %877 = vmatpush.msra.mxu0 0.0
    %878 = vmatpush.msra.mxu0 0.0
    %879 = vmatpush.msra.mxu0 0.0
    %880 = vmatpush.msra.mxu0 0.0
    %881 = vmatpush.msra.mxu0 0.0
    %882 = vmatpush.msra.mxu0 0.0
    %883 = vmatpush.msra.mxu0 0.0
    %884 = vmatpush.msra.mxu0 0.0
    %885 = vmatpush.msra.mxu0 0.0
    %886 = vmatpush.msra.mxu0 0.0
    %887 = vmatpush.msra.mxu0 0.0
    %888 = vmatpush.msra.mxu0 0.0
    %889 = vmatpush.msra.mxu0 0.0
    %890 = vmatpush.msra.mxu0 %v864
    %891 = vmatmul.f32.gmra.mxu0 %v858
    %v892 = vpop.f32.mrf.mxu0
    %v893 = vadd.f32 0.0, %v892
    %894 = vmatmul.f32.gmra.mxu0 %v861
    %v895 = vpop.f32.mrf.mxu0
    %v896 = vadd.f32 0.0, %v895
    %897 = vdwg.mxu0
    %898 = vmatpush.msra.mxu0 0.0
    %899 = vmatpush.msra.mxu0 0.0
    %900 = vmatpush.msra.mxu0 0.0
    %901 = vmatpush.msra.mxu0 0.0
    %902 = vmatpush.msra.mxu0 0.0
    %903 = vmatpush.msra.mxu0 0.0
    %904 = vmatpush.msra.mxu0 0.0
    %905 = vmatpush.msra.mxu0 0.0
    %906 = vmatpush.msra.mxu0 0.0
    %907 = vmatpush.msra.mxu0 0.0
    %908 = vmatpush.msra.mxu0 0.0
    %909 = vmatpush.msra.mxu0 0.0
    %910 = vmatpush.msra.mxu0 0.0
    %911 = vmatpush.msra.mxu0 0.0
    %912 = vmatpush.msra.mxu0 0.0
    %913 = vmatpush.msra.mxu0 %v867
    %914 = vmatmul.f32.gmra.mxu0 %v858
    %v915 = vpop.f32.mrf.mxu0
    %v916 = vadd.f32 0.0, %v915
    %917 = vmatmul.f32.gmra.mxu0 %v861
    %v918 = vpop.f32.mrf.mxu0
    %v919 = vadd.f32 0.0, %v918
    %920 = vdwg.mxu0
    %921 = vmatpush.msra.mxu0 0.0
    %922 = vmatpush.msra.mxu0 0.0
    %923 = vmatpush.msra.mxu0 0.0
    %924 = vmatpush.msra.mxu0 0.0
    %925 = vmatpush.msra.mxu0 0.0
    %926 = vmatpush.msra.mxu0 0.0
    %927 = vmatpush.msra.mxu0 0.0
    %928 = vmatpush.msra.mxu0 0.0
    %929 = vmatpush.msra.mxu0 0.0
    %930 = vmatpush.msra.mxu0 0.0
    %931 = vmatpush.msra.mxu0 0.0
    %932 = vmatpush.msra.mxu0 0.0
    %933 = vmatpush.msra.mxu0 0.0
    %934 = vmatpush.msra.mxu0 0.0
    %935 = vmatpush.msra.mxu0 0.0
    %936 = vmatpush.msra.mxu0 %v870
    %937 = vmatmul.f32.gmra.mxu0 %v858
    %v938 = vpop.f32.mrf.mxu0
    %v939 = vadd.f32 0.0, %v938
    %940 = vmatmul.f32.gmra.mxu0 %v861
    %v941 = vpop.f32.mrf.mxu0
    %v942 = vadd.f32 0.0, %v941
    %943 = vdwg.mxu0
    %944 = vmatpush.msra.mxu0 0.0
    %945 = vmatpush.msra.mxu0 0.0
    %946 = vmatpush.msra.mxu0 0.0
    %947 = vmatpush.msra.mxu0 0.0
    %948 = vmatpush.msra.mxu0 0.0
    %949 = vmatpush.msra.mxu0 0.0
    %950 = vmatpush.msra.mxu0 0.0
    %951 = vmatpush.msra.mxu0 0.0
    %952 = vmatpush.msra.mxu0 0.0
    %953 = vmatpush.msra.mxu0 0.0
    %954 = vmatpush.msra.mxu0 0.0
    %955 = vmatpush.msra.mxu0 0.0
    %956 = vmatpush.msra.mxu0 0.0
    %957 = vmatpush.msra.mxu0 0.0
    %958 = vmatpush.msra.mxu0 0.0
    %959 = vmatpush.msra.mxu0 %v873
    %960 = vmatmul.f32.gmra.mxu0 %v858
    %v961 = vpop.f32.mrf.mxu0
    %v962 = vadd.f32 0.0, %v961
    %963 = vmatmul.f32.gmra.mxu0 %v861
    %v964 = vpop.f32.mrf.mxu0
    %v965 = vadd.f32 0.0, %v964
    %966 = vdwg.mxu0
    %v967 = vadd.f32 %v767, %v893
    %v968 = vadd.f32 %v790, %v916
    %v969 = vadd.f32 %v813, %v939
    %v970 = vadd.f32 %v836, %v962
    %v971 = vadd.f32 %v770, %v896
    %v972 = vadd.f32 %v793, %v919
    %v973 = vadd.f32 %v816, %v942
    %v974 = vadd.f32 %v839, %v965
    %975 = vrot.lane.b32.xlu0 %v597, 94
    %v976 = vpop.permute.xlu0 %975
    %977 = vrot.lane.b32.xlu0 %v598, 94
    %v978 = vpop.permute.xlu0 %977
    %979 = vrot.lane.b32.xlu0 %v599, 94
    %v980 = vpop.permute.xlu0 %979
    %981 = vrot.lane.b32.xlu0 %v600, 94
    %v982 = vpop.permute.xlu0 %981
    %vm983 = vcmp.lt.s32.totalorder %v86, 94
    %v984 = vsel %vm983, %v980, %v982
    %v985 = vsel %vm983, %v978, %v980
    %v986 = vsel %vm983, %v976, %v978
    %v987 = vsel %vm983, %v982, %v976
    %s988 = scalar_lea.vmem %s3, 48
    %v989 = vld [vmem:[%s988] sm:$0xff]
    %v990 = vld [vmem:[%s988 + $0x8] sm:$0xff]
    %v992 = vsel %vm619, %v989, 0
    %v995 = vsel %vm619, %v990, 0
    %v998 = vsel %vm626, %v986, 0
    %v1001 = vsel %vm626, %v985, 0
    %v1004 = vsel %vm626, %v984, 0
    %v1007 = vsel %vm626, %v987, 0
    %1009 = vmatpush.msra.mxu0 0.0
    %1010 = vmatpush.msra.mxu0 0.0
    %1011 = vmatpush.msra.mxu0 0.0
    %1012 = vmatpush.msra.mxu0 0.0
    %1013 = vmatpush.msra.mxu0 0.0
    %1014 = vmatpush.msra.mxu0 0.0
    %1015 = vmatpush.msra.mxu0 0.0
    %1016 = vmatpush.msra.mxu0 0.0
    %1017 = vmatpush.msra.mxu0 0.0
    %1018 = vmatpush.msra.mxu0 0.0
    %1019 = vmatpush.msra.mxu0 0.0
    %1020 = vmatpush.msra.mxu0 0.0
    %1021 = vmatpush.msra.mxu0 0.0
    %1022 = vmatpush.msra.mxu0 0.0
    %1023 = vmatpush.msra.mxu0 0.0
    %1024 = vmatpush.msra.mxu0 %v998
    %1025 = vmatmul.f32.gmra.mxu0 %v992
    %v1026 = vpop.f32.mrf.mxu0
    %v1027 = vadd.f32 0.0, %v1026
    %1028 = vmatmul.f32.gmra.mxu0 %v995
    %v1029 = vpop.f32.mrf.mxu0
    %v1030 = vadd.f32 0.0, %v1029
    %1031 = vdwg.mxu0
    %1032 = vmatpush.msra.mxu0 0.0
    %1033 = vmatpush.msra.mxu0 0.0
    %1034 = vmatpush.msra.mxu0 0.0
    %1035 = vmatpush.msra.mxu0 0.0
    %1036 = vmatpush.msra.mxu0 0.0
    %1037 = vmatpush.msra.mxu0 0.0
    %1038 = vmatpush.msra.mxu0 0.0
    %1039 = vmatpush.msra.mxu0 0.0
    %1040 = vmatpush.msra.mxu0 0.0
    %1041 = vmatpush.msra.mxu0 0.0
    %1042 = vmatpush.msra.mxu0 0.0
    %1043 = vmatpush.msra.mxu0 0.0
    %1044 = vmatpush.msra.mxu0 0.0
    %1045 = vmatpush.msra.mxu0 0.0
    %1046 = vmatpush.msra.mxu0 0.0
    %1047 = vmatpush.msra.mxu0 %v1001
    %1048 = vmatmul.f32.gmra.mxu0 %v992
    %v1049 = vpop.f32.mrf.mxu0
    %v1050 = vadd.f32 0.0, %v1049
    %1051 = vmatmul.f32.gmra.mxu0 %v995
    %v1052 = vpop.f32.mrf.mxu0
    %v1053 = vadd.f32 0.0, %v1052
    %1054 = vdwg.mxu0
    %1055 = vmatpush.msra.mxu0 0.0
    %1056 = vmatpush.msra.mxu0 0.0
    %1057 = vmatpush.msra.mxu0 0.0
    %1058 = vmatpush.msra.mxu0 0.0
    %1059 = vmatpush.msra.mxu0 0.0
    %1060 = vmatpush.msra.mxu0 0.0
    %1061 = vmatpush.msra.mxu0 0.0
    %1062 = vmatpush.msra.mxu0 0.0
    %1063 = vmatpush.msra.mxu0 0.0
    %1064 = vmatpush.msra.mxu0 0.0
    %1065 = vmatpush.msra.mxu0 0.0
    %1066 = vmatpush.msra.mxu0 0.0
    %1067 = vmatpush.msra.mxu0 0.0
    %1068 = vmatpush.msra.mxu0 0.0
    %1069 = vmatpush.msra.mxu0 0.0
    %1070 = vmatpush.msra.mxu0 %v1004
    %1071 = vmatmul.f32.gmra.mxu0 %v992
    %v1072 = vpop.f32.mrf.mxu0
    %v1073 = vadd.f32 0.0, %v1072
    %1074 = vmatmul.f32.gmra.mxu0 %v995
    %v1075 = vpop.f32.mrf.mxu0
    %v1076 = vadd.f32 0.0, %v1075
    %1077 = vdwg.mxu0
    %1078 = vmatpush.msra.mxu0 0.0
    %1079 = vmatpush.msra.mxu0 0.0
    %1080 = vmatpush.msra.mxu0 0.0
    %1081 = vmatpush.msra.mxu0 0.0
    %1082 = vmatpush.msra.mxu0 0.0
    %1083 = vmatpush.msra.mxu0 0.0
    %1084 = vmatpush.msra.mxu0 0.0
    %1085 = vmatpush.msra.mxu0 0.0
    %1086 = vmatpush.msra.mxu0 0.0
    %1087 = vmatpush.msra.mxu0 0.0
    %1088 = vmatpush.msra.mxu0 0.0
    %1089 = vmatpush.msra.mxu0 0.0
    %1090 = vmatpush.msra.mxu0 0.0
    %1091 = vmatpush.msra.mxu0 0.0
    %1092 = vmatpush.msra.mxu0 0.0
    %1093 = vmatpush.msra.mxu0 %v1007
    %1094 = vmatmul.f32.gmra.mxu0 %v992
    %v1095 = vpop.f32.mrf.mxu0
    %v1096 = vadd.f32 0.0, %v1095
    %1097 = vmatmul.f32.gmra.mxu0 %v995
    %v1098 = vpop.f32.mrf.mxu0
    %v1099 = vadd.f32 0.0, %v1098
    %1100 = vdwg.mxu0
    %v1101 = vadd.f32 %v967, %v1027
    %v1102 = vadd.f32 %v968, %v1050
    %v1103 = vadd.f32 %v969, %v1073
    %v1104 = vadd.f32 %v970, %v1096
    %v1105 = vadd.f32 %v971, %v1030
    %v1106 = vadd.f32 %v972, %v1053
    %v1107 = vadd.f32 %v973, %v1076
    %v1108 = vadd.f32 %v974, %v1099
    %v1109 = vld [vmem:[%s4] sm:$0xff]
    %v1110 = vld [vmem:[%s4 + $0x8] sm:$0xff]
    %1112 = vset.pattern.permute.xlu0 0
    %1113 = vperm.xlu0 %1112, %v1109
    %v1114 = vpop.permute.xlu0 %1113
    %1117 = vset.pattern.permute.xlu0 0
    %1118 = vperm.xlu0 %1117, %v1110
    %v1119 = vpop.permute.xlu0 %1118
    %v1121 = vadd.f32 %v1101, %v1114
    %v1122 = vadd.f32 %v1102, %v1114
    %v1123 = vadd.f32 %v1103, %v1114
    %v1124 = vadd.f32 %v1104, %v1114
    %v1125 = vadd.f32 %v1105, %v1119
    %v1126 = vadd.f32 %v1106, %v1119
    %v1127 = vadd.f32 %v1107, %v1119
    %v1128 = vadd.f32 %v1108, %v1119
    %v1129 = vmax.f32 %v1121, 0.0
    %v1130 = vmax.f32 %v1122, 0.0
    %v1131 = vmax.f32 %v1123, 0.0
    %v1132 = vmax.f32 %v1124, 0.0
    %v1133 = vmax.f32 %v1125, 0.0
    %v1134 = vmax.f32 %v1126, 0.0
    %v1135 = vmax.f32 %v1127, 0.0
    %v1136 = vmax.f32 %v1128, 0.0
    %1137 = vrot.lane.b32.xlu0 %v1129, 126
    %v1138 = vpop.permute.xlu0 %1137
    %1139 = vrot.lane.b32.xlu0 %v1133, 126
    %v1140 = vpop.permute.xlu0 %1139
    %1141 = vrot.lane.b32.xlu0 %v1130, 126
    %v1142 = vpop.permute.xlu0 %1141
    %1143 = vrot.lane.b32.xlu0 %v1134, 126
    %v1144 = vpop.permute.xlu0 %1143
    %1145 = vrot.lane.b32.xlu0 %v1131, 126
    %v1146 = vpop.permute.xlu0 %1145
    %1147 = vrot.lane.b32.xlu0 %v1135, 126
    %v1148 = vpop.permute.xlu0 %1147
    %1149 = vrot.lane.b32.xlu0 %v1132, 126
    %v1150 = vpop.permute.xlu0 %1149
    %1151 = vrot.lane.b32.xlu0 %v1136, 126
    %v1152 = vpop.permute.xlu0 %1151
    %v1153 = vsel %vm611, %v1146, %v1150
    %v1154 = vsel %vm611, %v1148, %v1152
    %v1155 = vsel %vm611, %v1142, %v1146
    %v1156 = vsel %vm611, %v1144, %v1148
    %v1157 = vsel %vm611, %v1138, %v1142
    %v1158 = vsel %vm611, %v1140, %v1144
    %v1159 = vsel %vm611, %v1150, %v1138
    %v1160 = vsel %vm611, %v1152, %v1140
    %v1161 = vmax.f32 %v1129, %v1157
    %v1162 = vmax.f32 %v1130, %v1155
    %v1163 = vmax.f32 %v1131, %v1153
    %v1164 = vmax.f32 %v1132, %v1159
    %v1165 = vmax.f32 %v1133, %v1158
    %v1166 = vmax.f32 %v1134, %v1156
    %v1167 = vmax.f32 %v1135, %v1154
    %v1168 = vmax.f32 %v1136, %v1160
    %1169 = vrot.lane.b32.xlu0 %v1129, 96
    %v1170 = vpop.permute.xlu0 %1169
    %1171 = vrot.lane.b32.xlu0 %v1133, 96
    %v1172 = vpop.permute.xlu0 %1171
    %1173 = vrot.lane.b32.xlu0 %v1130, 96
    %v1174 = vpop.permute.xlu0 %1173
    %1175 = vrot.lane.b32.xlu0 %v1134, 96
    %v1176 = vpop.permute.xlu0 %1175
    %1177 = vrot.lane.b32.xlu0 %v1131, 96
    %v1178 = vpop.permute.xlu0 %1177
    %1179 = vrot.lane.b32.xlu0 %v1135, 96
    %v1180 = vpop.permute.xlu0 %1179
    %1181 = vrot.lane.b32.xlu0 %v1132, 96
    %v1182 = vpop.permute.xlu0 %1181
    %1183 = vrot.lane.b32.xlu0 %v1136, 96
    %v1184 = vpop.permute.xlu0 %1183
    %v1185 = vsel %vm849, %v1178, %v1182
    %v1186 = vsel %vm849, %v1180, %v1184
    %v1187 = vsel %vm849, %v1174, %v1178
    %v1188 = vsel %vm849, %v1176, %v1180
    %v1189 = vsel %vm849, %v1170, %v1174
    %v1190 = vsel %vm849, %v1172, %v1176
    %v1191 = vsel %vm849, %v1182, %v1170
    %v1192 = vsel %vm849, %v1184, %v1172
    %v1193 = vmax.f32 %v1161, %v1189
    %v1194 = vmax.f32 %v1162, %v1187
    %v1195 = vmax.f32 %v1163, %v1185
    %v1196 = vmax.f32 %v1164, %v1191
    %v1197 = vmax.f32 %v1165, %v1190
    %v1198 = vmax.f32 %v1166, %v1188
    %v1199 = vmax.f32 %v1167, %v1186
    %v1200 = vmax.f32 %v1168, %v1192
    %1201 = vrot.lane.b32.xlu0 %v1129, 94
    %v1202 = vpop.permute.xlu0 %1201
    %1203 = vrot.lane.b32.xlu0 %v1133, 94
    %v1204 = vpop.permute.xlu0 %1203
    %1205 = vrot.lane.b32.xlu0 %v1130, 94
    %v1206 = vpop.permute.xlu0 %1205
    %1207 = vrot.lane.b32.xlu0 %v1134, 94
    %v1208 = vpop.permute.xlu0 %1207
    %1209 = vrot.lane.b32.xlu0 %v1131, 94
    %v1210 = vpop.permute.xlu0 %1209
    %1211 = vrot.lane.b32.xlu0 %v1135, 94
    %v1212 = vpop.permute.xlu0 %1211
    %1213 = vrot.lane.b32.xlu0 %v1132, 94
    %v1214 = vpop.permute.xlu0 %1213
    %1215 = vrot.lane.b32.xlu0 %v1136, 94
    %v1216 = vpop.permute.xlu0 %1215
    %v1217 = vsel %vm983, %v1210, %v1214
    %v1218 = vsel %vm983, %v1212, %v1216
    %v1219 = vsel %vm983, %v1206, %v1210
    %v1220 = vsel %vm983, %v1208, %v1212
    %v1221 = vsel %vm983, %v1202, %v1206
    %v1222 = vsel %vm983, %v1204, %v1208
    %v1223 = vsel %vm983, %v1214, %v1202
    %v1224 = vsel %vm983, %v1216, %v1204
    %v1225 = vmax.f32 %v1193, %v1221
    %v1226 = vmax.f32 %v1194, %v1219
    %v1227 = vmax.f32 %v1195, %v1217
    %v1228 = vmax.f32 %v1196, %v1223
    %v1229 = vmax.f32 %v1197, %v1222
    %v1230 = vmax.f32 %v1198, %v1220
    %v1231 = vmax.f32 %v1199, %v1218
    %v1232 = vmax.f32 %v1200, %v1224
    %v1233 = vld [vmem:[#allocation2] sm:$0xff]
    %v1234 = vld [vmem:[#allocation2 + $0x8] sm:$0xff]
    %v1235 = vld [vmem:[#allocation2 + $0x10] sm:$0xff]
    %v1236 = vld [vmem:[#allocation2 + $0x18] sm:$0xff]
    %v1237 = vld [vmem:[#allocation2 + $0x20] sm:$0xff]
    %v1238 = vld [vmem:[#allocation2 + $0x28] sm:$0xff]
    %v1239 = vld [vmem:[#allocation2 + $0x30] sm:$0xff]
    %v1240 = vld [vmem:[#allocation2 + $0x38] sm:$0xff]
    %v1241 = vld [vmem:[#allocation2 + $0x40] sm:$0xff]
    %v1242 = vld [vmem:[#allocation2 + $0x48] sm:$0xff]
    %v1243 = vld [vmem:[#allocation2 + $0x50] sm:$0xff]
    %v1244 = vld [vmem:[#allocation2 + $0x58] sm:$0xff]
    %v1245 = vld [vmem:[#allocation2 + $0x60] sm:$0xff]
    %v1246 = vld [vmem:[#allocation2 + $0x68] sm:$0xff]
    %v1247 = vld [vmem:[#allocation2 + $0x70] sm:$0xff]
    %v1248 = vld [vmem:[#allocation2 + $0x78] sm:$0xff]
    %v1249 = vld [vmem:[#allocation2 + $0x80] sm:$0xff]
    %v1250 = vld [vmem:[#allocation2 + $0x88] sm:$0xff]
    %v1251 = vld [vmem:[#allocation2 + $0x90] sm:$0xff]
    %v1252 = vld [vmem:[#allocation2 + $0x98] sm:$0xff]
    %v1253 = vld [vmem:[#allocation2 + $0xa0] sm:$0xff]
    %v1254 = vld [vmem:[#allocation2 + $0xa8] sm:$0xff]
    %v1255 = vld [vmem:[#allocation2 + $0xb0] sm:$0xff]
    %v1256 = vld [vmem:[#allocation2 + $0xb8] sm:$0xff]
    %v1257 = vld [vmem:[#allocation2 + $0xc0] sm:$0xff]
    %v1258 = vld [vmem:[#allocation2 + $0xc8] sm:$0xff]
    %v1259 = vld [vmem:[#allocation2 + $0xd0] sm:$0xff]
    %v1260 = vld [vmem:[#allocation2 + $0xd8] sm:$0xff]
    %v1261 = vld [vmem:[#allocation2 + $0xe0] sm:$0xff]
    %v1262 = vld [vmem:[#allocation2 + $0xe8] sm:$0xff]
    %v1263 = vld [vmem:[#allocation2 + $0xf0] sm:$0xff]
    %v1264 = vld [vmem:[#allocation2 + $0xf8] sm:$0xff]
    %v1265 = vld [vmem:[#allocation2 + $0x100] sm:$0xff]
    %v1266 = vld [vmem:[#allocation2 + $0x108] sm:$0xff]
    %v1267 = vld [vmem:[#allocation2 + $0x110] sm:$0xff]
    %v1268 = vld [vmem:[#allocation2 + $0x118] sm:$0xff]
    %v1269 = vld [vmem:[#allocation2 + $0x120] sm:$0xff]
    %v1270 = vld [vmem:[#allocation2 + $0x128] sm:$0xff]
    %v1271 = vld [vmem:[#allocation2 + $0x130] sm:$0xff]
    %v1272 = vld [vmem:[#allocation2 + $0x138] sm:$0xff]
    %v1273 = vld [vmem:[#allocation2 + $0x140] sm:$0xff]
    %v1274 = vld [vmem:[#allocation2 + $0x148] sm:$0xff]
    %v1275 = vld [vmem:[#allocation2 + $0x150] sm:$0xff]
    %v1276 = vld [vmem:[#allocation2 + $0x158] sm:$0xff]
    %v1277 = vld [vmem:[#allocation2 + $0x160] sm:$0xff]
    %v1278 = vld [vmem:[#allocation2 + $0x168] sm:$0xff]
    %v1279 = vld [vmem:[#allocation2 + $0x170] sm:$0xff]
    %v1280 = vld [vmem:[#allocation2 + $0x178] sm:$0xff]
    %v1281 = vld [vmem:[#allocation2 + $0x180] sm:$0xff]
    %v1282 = vld [vmem:[#allocation2 + $0x188] sm:$0xff]
    %v1283 = vld [vmem:[#allocation2 + $0x190] sm:$0xff]
    %v1284 = vld [vmem:[#allocation2 + $0x198] sm:$0xff]
    %v1285 = vld [vmem:[#allocation2 + $0x1a0] sm:$0xff]
    %v1286 = vld [vmem:[#allocation2 + $0x1a8] sm:$0xff]
    %v1287 = vld [vmem:[#allocation2 + $0x1b0] sm:$0xff]
    %v1288 = vld [vmem:[#allocation2 + $0x1b8] sm:$0xff]
    %v1289 = vld [vmem:[#allocation2 + $0x1c0] sm:$0xff]
    %v1290 = vld [vmem:[#allocation2 + $0x1c8] sm:$0xff]
    %v1291 = vld [vmem:[#allocation2 + $0x1d0] sm:$0xff]
    %v1292 = vld [vmem:[#allocation2 + $0x1d8] sm:$0xff]
    %v1293 = vld [vmem:[#allocation2 + $0x1e0] sm:$0xff]
    %v1294 = vld [vmem:[#allocation2 + $0x1e8] sm:$0xff]
    %v1295 = vld [vmem:[#allocation2 + $0x1f0] sm:$0xff]
    %v1296 = vld [vmem:[#allocation2 + $0x1f8] sm:$0xff]
    %v1297 = vld [vmem:[#allocation2 + $0x200] sm:$0xff]
    %v1298 = vld [vmem:[#allocation2 + $0x208] sm:$0xff]
    %v1299 = vld [vmem:[#allocation2 + $0x210] sm:$0xff]
    %v1300 = vld [vmem:[#allocation2 + $0x218] sm:$0xff]
    %v1301 = vld [vmem:[#allocation2 + $0x220] sm:$0xff]
    %v1302 = vld [vmem:[#allocation2 + $0x228] sm:$0xff]
    %v1303 = vld [vmem:[#allocation2 + $0x230] sm:$0xff]
    %v1304 = vld [vmem:[#allocation2 + $0x238] sm:$0xff]
    %v1305 = vld [vmem:[#allocation2 + $0x240] sm:$0xff]
    %v1306 = vld [vmem:[#allocation2 + $0x248] sm:$0xff]
    %v1307 = vld [vmem:[#allocation2 + $0x250] sm:$0xff]
    %v1308 = vld [vmem:[#allocation2 + $0x258] sm:$0xff]
    %v1309 = vld [vmem:[#allocation2 + $0x260] sm:$0xff]
    %v1310 = vld [vmem:[#allocation2 + $0x268] sm:$0xff]
    %v1311 = vld [vmem:[#allocation2 + $0x270] sm:$0xff]
    %v1312 = vld [vmem:[#allocation2 + $0x278] sm:$0xff]
    %v1313 = vld [vmem:[#allocation2 + $0x280] sm:$0xff]
    %v1314 = vld [vmem:[#allocation2 + $0x288] sm:$0xff]
    %v1315 = vld [vmem:[#allocation2 + $0x290] sm:$0xff]
    %v1316 = vld [vmem:[#allocation2 + $0x298] sm:$0xff]
    %v1317 = vld [vmem:[#allocation2 + $0x2a0] sm:$0xff]
    %v1318 = vld [vmem:[#allocation2 + $0x2a8] sm:$0xff]
    %v1319 = vld [vmem:[#allocation2 + $0x2b0] sm:$0xff]
    %v1320 = vld [vmem:[#allocation2 + $0x2b8] sm:$0xff]
    %v1321 = vld [vmem:[#allocation2 + $0x2c0] sm:$0xff]
    %v1322 = vld [vmem:[#allocation2 + $0x2c8] sm:$0xff]
    %v1323 = vld [vmem:[#allocation2 + $0x2d0] sm:$0xff]
    %v1324 = vld [vmem:[#allocation2 + $0x2d8] sm:$0xff]
    %v1325 = vld [vmem:[#allocation2 + $0x2e0] sm:$0xff]
    %v1326 = vld [vmem:[#allocation2 + $0x2e8] sm:$0xff]
    %v1327 = vld [vmem:[#allocation2 + $0x2f0] sm:$0xff]
    %v1328 = vld [vmem:[#allocation2 + $0x2f8] sm:$0xff]
    %v1329 = vld [vmem:[#allocation2 + $0x300] sm:$0xff]
    %v1330 = vld [vmem:[#allocation2 + $0x308] sm:$0xff]
    %v1331 = vld [vmem:[#allocation2 + $0x310] sm:$0xff]
    %v1332 = vld [vmem:[#allocation2 + $0x318] sm:$0xff]
    %v1333 = vld [vmem:[#allocation2 + $0x320] sm:$0xff]
    %v1334 = vld [vmem:[#allocation2 + $0x328] sm:$0xff]
    %v1335 = vld [vmem:[#allocation2 + $0x330] sm:$0xff]
    %v1336 = vld [vmem:[#allocation2 + $0x338] sm:$0xff]
    %v1337 = vld [vmem:[#allocation2 + $0x340] sm:$0xff]
    %v1338 = vld [vmem:[#allocation2 + $0x348] sm:$0xff]
    %v1339 = vld [vmem:[#allocation2 + $0x350] sm:$0xff]
    %v1340 = vld [vmem:[#allocation2 + $0x358] sm:$0xff]
    %v1341 = vld [vmem:[#allocation2 + $0x360] sm:$0xff]
    %v1342 = vld [vmem:[#allocation2 + $0x368] sm:$0xff]
    %v1343 = vld [vmem:[#allocation2 + $0x370] sm:$0xff]
    %v1344 = vld [vmem:[#allocation2 + $0x378] sm:$0xff]
    %v1345 = vld [vmem:[#allocation2 + $0x380] sm:$0xff]
    %v1346 = vld [vmem:[#allocation2 + $0x388] sm:$0xff]
    %v1347 = vld [vmem:[#allocation2 + $0x390] sm:$0xff]
    %v1348 = vld [vmem:[#allocation2 + $0x398] sm:$0xff]
    %v1349 = vld [vmem:[#allocation2 + $0x3a0] sm:$0xff]
    %v1350 = vld [vmem:[#allocation2 + $0x3a8] sm:$0xff]
    %v1351 = vld [vmem:[#allocation2 + $0x3b0] sm:$0xff]
    %v1352 = vld [vmem:[#allocation2 + $0x3b8] sm:$0xff]
    %v1353 = vld [vmem:[#allocation2 + $0x3c0] sm:$0xff]
    %v1354 = vld [vmem:[#allocation2 + $0x3c8] sm:$0xff]
    %v1355 = vld [vmem:[#allocation2 + $0x3d0] sm:$0xff]
    %v1356 = vld [vmem:[#allocation2 + $0x3d8] sm:$0xff]
    %v1357 = vld [vmem:[#allocation2 + $0x3e0] sm:$0xff]
    %v1358 = vld [vmem:[#allocation2 + $0x3e8] sm:$0xff]
    %v1359 = vld [vmem:[#allocation2 + $0x3f0] sm:$0xff]
    %v1360 = vld [vmem:[#allocation2 + $0x3f8] sm:$0xff]
    %v1361 = vld [vmem:[#allocation2 + $0x400] sm:$0xff]
    %v1362 = vld [vmem:[#allocation2 + $0x408] sm:$0xff]
    %v1363 = vld [vmem:[#allocation2 + $0x410] sm:$0xff]
    %v1364 = vld [vmem:[#allocation2 + $0x418] sm:$0xff]
    %v1365 = vld [vmem:[#allocation2 + $0x420] sm:$0xff]
    %v1366 = vld [vmem:[#allocation2 + $0x428] sm:$0xff]
    %v1367 = vld [vmem:[#allocation2 + $0x430] sm:$0xff]
    %v1368 = vld [vmem:[#allocation2 + $0x438] sm:$0xff]
    %v1369 = vld [vmem:[#allocation2 + $0x440] sm:$0xff]
    %v1370 = vld [vmem:[#allocation2 + $0x448] sm:$0xff]
    %v1371 = vld [vmem:[#allocation2 + $0x450] sm:$0xff]
    %v1372 = vld [vmem:[#allocation2 + $0x458] sm:$0xff]
    %v1373 = vld [vmem:[#allocation2 + $0x460] sm:$0xff]
    %v1374 = vld [vmem:[#allocation2 + $0x468] sm:$0xff]
    %v1375 = vld [vmem:[#allocation2 + $0x470] sm:$0xff]
    %v1376 = vld [vmem:[#allocation2 + $0x478] sm:$0xff]
    %v1377 = vld [vmem:[#allocation2 + $0x480] sm:$0xff]
    %v1378 = vld [vmem:[#allocation2 + $0x488] sm:$0xff]
    %v1379 = vld [vmem:[#allocation2 + $0x490] sm:$0xff]
    %v1380 = vld [vmem:[#allocation2 + $0x498] sm:$0xff]
    %v1381 = vld [vmem:[#allocation2 + $0x4a0] sm:$0xff]
    %v1382 = vld [vmem:[#allocation2 + $0x4a8] sm:$0xff]
    %v1383 = vld [vmem:[#allocation2 + $0x4b0] sm:$0xff]
    %v1384 = vld [vmem:[#allocation2 + $0x4b8] sm:$0xff]
    %v1385 = vld [vmem:[#allocation2 + $0x4c0] sm:$0xff]
    %v1386 = vld [vmem:[#allocation2 + $0x4c8] sm:$0xff]
    %v1387 = vld [vmem:[#allocation2 + $0x4d0] sm:$0xff]
    %v1388 = vld [vmem:[#allocation2 + $0x4d8] sm:$0xff]
    %v1389 = vld [vmem:[#allocation2 + $0x4e0] sm:$0xff]
    %v1390 = vld [vmem:[#allocation2 + $0x4e8] sm:$0xff]
    %v1391 = vld [vmem:[#allocation2 + $0x4f0] sm:$0xff]
    %v1392 = vld [vmem:[#allocation2 + $0x4f8] sm:$0xff]
    %v1393 = vld [vmem:[#allocation2 + $0x500] sm:$0xff]
    %v1394 = vld [vmem:[#allocation2 + $0x508] sm:$0xff]
    %v1395 = vld [vmem:[#allocation2 + $0x510] sm:$0xff]
    %v1396 = vld [vmem:[#allocation2 + $0x518] sm:$0xff]
    %v1397 = vld [vmem:[#allocation2 + $0x520] sm:$0xff]
    %v1398 = vld [vmem:[#allocation2 + $0x528] sm:$0xff]
    %v1399 = vld [vmem:[#allocation2 + $0x530] sm:$0xff]
    %v1400 = vld [vmem:[#allocation2 + $0x538] sm:$0xff]
    %v1401 = vld [vmem:[#allocation2 + $0x540] sm:$0xff]
    %v1402 = vld [vmem:[#allocation2 + $0x548] sm:$0xff]
    %v1403 = vld [vmem:[#allocation2 + $0x550] sm:$0xff]
    %v1404 = vld [vmem:[#allocation2 + $0x558] sm:$0xff]
    %v1405 = vld [vmem:[#allocation2 + $0x560] sm:$0xff]
    %v1406 = vld [vmem:[#allocation2 + $0x568] sm:$0xff]
    %v1407 = vld [vmem:[#allocation2 + $0x570] sm:$0xff]
    %v1408 = vld [vmem:[#allocation2 + $0x578] sm:$0xff]
    %v1409 = vld [vmem:[#allocation2 + $0x580] sm:$0xff]
    %v1410 = vld [vmem:[#allocation2 + $0x588] sm:$0xff]
    %v1411 = vld [vmem:[#allocation2 + $0x590] sm:$0xff]
    %v1412 = vld [vmem:[#allocation2 + $0x598] sm:$0xff]
    %v1413 = vld [vmem:[#allocation2 + $0x5a0] sm:$0xff]
    %v1414 = vld [vmem:[#allocation2 + $0x5a8] sm:$0xff]
    %v1415 = vld [vmem:[#allocation2 + $0x5b0] sm:$0xff]
    %v1416 = vld [vmem:[#allocation2 + $0x5b8] sm:$0xff]
    %v1417 = vld [vmem:[#allocation2 + $0x5c0] sm:$0xff]
    %v1418 = vld [vmem:[#allocation2 + $0x5c8] sm:$0xff]
    %v1419 = vld [vmem:[#allocation2 + $0x5d0] sm:$0xff]
    %v1420 = vld [vmem:[#allocation2 + $0x5d8] sm:$0xff]
    %v1421 = vld [vmem:[#allocation2 + $0x5e0] sm:$0xff]
    %v1422 = vld [vmem:[#allocation2 + $0x5e8] sm:$0xff]
    %v1423 = vld [vmem:[#allocation2 + $0x5f0] sm:$0xff]
    %v1424 = vld [vmem:[#allocation2 + $0x5f8] sm:$0xff]
    %1425 = vmatpush.msra.mxu0 %v1278
    %1426 = vmatpush.msra.mxu0 %v1275
    %1427 = vmatpush.msra.mxu0 %v1272
    %1428 = vmatpush.msra.mxu0 %v1269
    %1429 = vmatpush.msra.mxu0 %v1266
    %1430 = vmatpush.msra.mxu0 %v1263
    %1431 = vmatpush.msra.mxu0 %v1260
    %1432 = vmatpush.msra.mxu0 %v1257
    %1433 = vmatpush.msra.mxu0 %v1254
    %1434 = vmatpush.msra.mxu0 %v1251
    %1435 = vmatpush.msra.mxu0 %v1248
    %1436 = vmatpush.msra.mxu0 %v1245
    %1437 = vmatpush.msra.mxu0 %v1242
    %1438 = vmatpush.msra.mxu0 %v1239
    %1439 = vmatpush.msra.mxu0 %v1236
    %1440 = vmatpush.msra.mxu0 %v1233
    %1441 = vmatmul.f32.gmra.mxu0 %v1225
    %v1442 = vpop.f32.mrf.mxu0
    %v1443 = vadd.f32 0.0, %v1442
    %1444 = vmatmul.f32.gmra.mxu0 %v1229
    %v1445 = vpop.f32.mrf.mxu0
    %v1446 = vadd.f32 0.0, %v1445
    %1447 = vdwg.mxu0
    %1448 = vmatpush.msra.mxu0 %v1326
    %1449 = vmatpush.msra.mxu0 %v1323
    %1450 = vmatpush.msra.mxu0 %v1320
    %1451 = vmatpush.msra.mxu0 %v1317
    %1452 = vmatpush.msra.mxu0 %v1314
    %1453 = vmatpush.msra.mxu0 %v1311
    %1454 = vmatpush.msra.mxu0 %v1308
    %1455 = vmatpush.msra.mxu0 %v1305
    %1456 = vmatpush.msra.mxu0 %v1302
    %1457 = vmatpush.msra.mxu0 %v1299
    %1458 = vmatpush.msra.mxu0 %v1296
    %1459 = vmatpush.msra.mxu0 %v1293
    %1460 = vmatpush.msra.mxu0 %v1290
    %1461 = vmatpush.msra.mxu0 %v1287
    %1462 = vmatpush.msra.mxu0 %v1284
    %1463 = vmatpush.msra.mxu0 %v1281
    %1464 = vmatmul.f32.gmra.mxu0 %v1226
    %v1465 = vpop.f32.mrf.mxu0
    %v1466 = vadd.f32 %v1443, %v1465
    %1467 = vmatmul.f32.gmra.mxu0 %v1230
    %v1468 = vpop.f32.mrf.mxu0
    %v1469 = vadd.f32 %v1446, %v1468
    %1470 = vdwg.mxu0
    %1471 = vmatpush.msra.mxu0 %v1374
    %1472 = vmatpush.msra.mxu0 %v1371
    %1473 = vmatpush.msra.mxu0 %v1368
    %1474 = vmatpush.msra.mxu0 %v1365
    %1475 = vmatpush.msra.mxu0 %v1362
    %1476 = vmatpush.msra.mxu0 %v1359
    %1477 = vmatpush.msra.mxu0 %v1356
    %1478 = vmatpush.msra.mxu0 %v1353
    %1479 = vmatpush.msra.mxu0 %v1350
    %1480 = vmatpush.msra.mxu0 %v1347
    %1481 = vmatpush.msra.mxu0 %v1344
    %1482 = vmatpush.msra.mxu0 %v1341
    %1483 = vmatpush.msra.mxu0 %v1338
    %1484 = vmatpush.msra.mxu0 %v1335
    %1485 = vmatpush.msra.mxu0 %v1332
    %1486 = vmatpush.msra.mxu0 %v1329
    %1487 = vmatmul.f32.gmra.mxu0 %v1227
    %v1488 = vpop.f32.mrf.mxu0
    %v1489 = vadd.f32 %v1466, %v1488
    %1490 = vmatmul.f32.gmra.mxu0 %v1231
    %v1491 = vpop.f32.mrf.mxu0
    %v1492 = vadd.f32 %v1469, %v1491
    %1493 = vdwg.mxu0
    %1494 = vmatpush.msra.mxu0 %v1422
    %1495 = vmatpush.msra.mxu0 %v1419
    %1496 = vmatpush.msra.mxu0 %v1416
    %1497 = vmatpush.msra.mxu0 %v1413
    %1498 = vmatpush.msra.mxu0 %v1410
    %1499 = vmatpush.msra.mxu0 %v1407
    %1500 = vmatpush.msra.mxu0 %v1404
    %1501 = vmatpush.msra.mxu0 %v1401
    %1502 = vmatpush.msra.mxu0 %v1398
    %1503 = vmatpush.msra.mxu0 %v1395
    %1504 = vmatpush.msra.mxu0 %v1392
    %1505 = vmatpush.msra.mxu0 %v1389
    %1506 = vmatpush.msra.mxu0 %v1386
    %1507 = vmatpush.msra.mxu0 %v1383
    %1508 = vmatpush.msra.mxu0 %v1380
    %1509 = vmatpush.msra.mxu0 %v1377
    %1510 = vmatmul.f32.gmra.mxu0 %v1228
    %v1511 = vpop.f32.mrf.mxu0
    %v1512 = vadd.f32 %v1489, %v1511
    %1513 = vmatmul.f32.gmra.mxu0 %v1232
    %v1514 = vpop.f32.mrf.mxu0
    %v1515 = vadd.f32 %v1492, %v1514
    %1516 = vdwg.mxu0
    %1517 = vmatpush.msra.mxu0 %v1279
    %1518 = vmatpush.msra.mxu0 %v1276
    %1519 = vmatpush.msra.mxu0 %v1273
    %1520 = vmatpush.msra.mxu0 %v1270
    %1521 = vmatpush.msra.mxu0 %v1267
    %1522 = vmatpush.msra.mxu0 %v1264
    %1523 = vmatpush.msra.mxu0 %v1261
    %1524 = vmatpush.msra.mxu0 %v1258
    %1525 = vmatpush.msra.mxu0 %v1255
    %1526 = vmatpush.msra.mxu0 %v1252
    %1527 = vmatpush.msra.mxu0 %v1249
    %1528 = vmatpush.msra.mxu0 %v1246
    %1529 = vmatpush.msra.mxu0 %v1243
    %1530 = vmatpush.msra.mxu0 %v1240
    %1531 = vmatpush.msra.mxu0 %v1237
    %1532 = vmatpush.msra.mxu0 %v1234
    %1533 = vmatmul.f32.gmra.mxu0 %v1225
    %v1534 = vpop.f32.mrf.mxu0
    %v1535 = vadd.f32 0.0, %v1534
    %1536 = vmatmul.f32.gmra.mxu0 %v1229
    %v1537 = vpop.f32.mrf.mxu0
    %v1538 = vadd.f32 0.0, %v1537
    %1539 = vdwg.mxu0
    %1540 = vmatpush.msra.mxu0 %v1327
    %1541 = vmatpush.msra.mxu0 %v1324
    %1542 = vmatpush.msra.mxu0 %v1321
    %1543 = vmatpush.msra.mxu0 %v1318
    %1544 = vmatpush.msra.mxu0 %v1315
    %1545 = vmatpush.msra.mxu0 %v1312
    %1546 = vmatpush.msra.mxu0 %v1309
    %1547 = vmatpush.msra.mxu0 %v1306
    %1548 = vmatpush.msra.mxu0 %v1303
    %1549 = vmatpush.msra.mxu0 %v1300
    %1550 = vmatpush.msra.mxu0 %v1297
    %1551 = vmatpush.msra.mxu0 %v1294
    %1552 = vmatpush.msra.mxu0 %v1291
    %1553 = vmatpush.msra.mxu0 %v1288
    %1554 = vmatpush.msra.mxu0 %v1285
    %1555 = vmatpush.msra.mxu0 %v1282
    %1556 = vmatmul.f32.gmra.mxu0 %v1226
    %v1557 = vpop.f32.mrf.mxu0
    %v1558 = vadd.f32 %v1535, %v1557
    %1559 = vmatmul.f32.gmra.mxu0 %v1230
    %v1560 = vpop.f32.mrf.mxu0
    %v1561 = vadd.f32 %v1538, %v1560
    %1562 = vdwg.mxu0
    %1563 = vmatpush.msra.mxu0 %v1375
    %1564 = vmatpush.msra.mxu0 %v1372
    %1565 = vmatpush.msra.mxu0 %v1369
    %1566 = vmatpush.msra.mxu0 %v1366
    %1567 = vmatpush.msra.mxu0 %v1363
    %1568 = vmatpush.msra.mxu0 %v1360
    %1569 = vmatpush.msra.mxu0 %v1357
    %1570 = vmatpush.msra.mxu0 %v1354
    %1571 = vmatpush.msra.mxu0 %v1351
    %1572 = vmatpush.msra.mxu0 %v1348
    %1573 = vmatpush.msra.mxu0 %v1345
    %1574 = vmatpush.msra.mxu0 %v1342
    %1575 = vmatpush.msra.mxu0 %v1339
    %1576 = vmatpush.msra.mxu0 %v1336
    %1577 = vmatpush.msra.mxu0 %v1333
    %1578 = vmatpush.msra.mxu0 %v1330
    %1579 = vmatmul.f32.gmra.mxu0 %v1227
    %v1580 = vpop.f32.mrf.mxu0
    %v1581 = vadd.f32 %v1558, %v1580
    %1582 = vmatmul.f32.gmra.mxu0 %v1231
    %v1583 = vpop.f32.mrf.mxu0
    %v1584 = vadd.f32 %v1561, %v1583
    %1585 = vdwg.mxu0
    %1586 = vmatpush.msra.mxu0 %v1423
    %1587 = vmatpush.msra.mxu0 %v1420
    %1588 = vmatpush.msra.mxu0 %v1417
    %1589 = vmatpush.msra.mxu0 %v1414
    %1590 = vmatpush.msra.mxu0 %v1411
    %1591 = vmatpush.msra.mxu0 %v1408
    %1592 = vmatpush.msra.mxu0 %v1405
    %1593 = vmatpush.msra.mxu0 %v1402
    %1594 = vmatpush.msra.mxu0 %v1399
    %1595 = vmatpush.msra.mxu0 %v1396
    %1596 = vmatpush.msra.mxu0 %v1393
    %1597 = vmatpush.msra.mxu0 %v1390
    %1598 = vmatpush.msra.mxu0 %v1387
    %1599 = vmatpush.msra.mxu0 %v1384
    %1600 = vmatpush.msra.mxu0 %v1381
    %1601 = vmatpush.msra.mxu0 %v1378
    %1602 = vmatmul.f32.gmra.mxu0 %v1228
    %v1603 = vpop.f32.mrf.mxu0
    %v1604 = vadd.f32 %v1581, %v1603
    %1605 = vmatmul.f32.gmra.mxu0 %v1232
    %v1606 = vpop.f32.mrf.mxu0
    %v1607 = vadd.f32 %v1584, %v1606
    %1608 = vdwg.mxu0
    %1609 = vmatpush.msra.mxu0 %v1280
    %1610 = vmatpush.msra.mxu0 %v1277
    %1611 = vmatpush.msra.mxu0 %v1274
    %1612 = vmatpush.msra.mxu0 %v1271
    %1613 = vmatpush.msra.mxu0 %v1268
    %1614 = vmatpush.msra.mxu0 %v1265
    %1615 = vmatpush.msra.mxu0 %v1262
    %1616 = vmatpush.msra.mxu0 %v1259
    %1617 = vmatpush.msra.mxu0 %v1256
    %1618 = vmatpush.msra.mxu0 %v1253
    %1619 = vmatpush.msra.mxu0 %v1250
    %1620 = vmatpush.msra.mxu0 %v1247
    %1621 = vmatpush.msra.mxu0 %v1244
    %1622 = vmatpush.msra.mxu0 %v1241
    %1623 = vmatpush.msra.mxu0 %v1238
    %1624 = vmatpush.msra.mxu0 %v1235
    %1625 = vmatmul.f32.gmra.mxu0 %v1225
    %v1626 = vpop.f32.mrf.mxu0
    %v1627 = vadd.f32 0.0, %v1626
    %1628 = vmatmul.f32.gmra.mxu0 %v1229
    %v1629 = vpop.f32.mrf.mxu0
    %v1630 = vadd.f32 0.0, %v1629
    %1631 = vdwg.mxu0
    %1632 = vmatpush.msra.mxu0 %v1328
    %1633 = vmatpush.msra.mxu0 %v1325
    %1634 = vmatpush.msra.mxu0 %v1322
    %1635 = vmatpush.msra.mxu0 %v1319
    %1636 = vmatpush.msra.mxu0 %v1316
    %1637 = vmatpush.msra.mxu0 %v1313
    %1638 = vmatpush.msra.mxu0 %v1310
    %1639 = vmatpush.msra.mxu0 %v1307
    %1640 = vmatpush.msra.mxu0 %v1304
    %1641 = vmatpush.msra.mxu0 %v1301
    %1642 = vmatpush.msra.mxu0 %v1298
    %1643 = vmatpush.msra.mxu0 %v1295
    %1644 = vmatpush.msra.mxu0 %v1292
    %1645 = vmatpush.msra.mxu0 %v1289
    %1646 = vmatpush.msra.mxu0 %v1286
    %1647 = vmatpush.msra.mxu0 %v1283
    %1648 = vmatmul.f32.gmra.mxu0 %v1226
    %v1649 = vpop.f32.mrf.mxu0
    %v1650 = vadd.f32 %v1627, %v1649
    %1651 = vmatmul.f32.gmra.mxu0 %v1230
    %v1652 = vpop.f32.mrf.mxu0
    %v1653 = vadd.f32 %v1630, %v1652
    %1654 = vdwg.mxu0
    %1655 = vmatpush.msra.mxu0 %v1376
    %1656 = vmatpush.msra.mxu0 %v1373
    %1657 = vmatpush.msra.mxu0 %v1370
    %1658 = vmatpush.msra.mxu0 %v1367
    %1659 = vmatpush.msra.mxu0 %v1364
    %1660 = vmatpush.msra.mxu0 %v1361
    %1661 = vmatpush.msra.mxu0 %v1358
    %1662 = vmatpush.msra.mxu0 %v1355
    %1663 = vmatpush.msra.mxu0 %v1352
    %1664 = vmatpush.msra.mxu0 %v1349
    %1665 = vmatpush.msra.mxu0 %v1346
    %1666 = vmatpush.msra.mxu0 %v1343
    %1667 = vmatpush.msra.mxu0 %v1340
    %1668 = vmatpush.msra.mxu0 %v1337
    %1669 = vmatpush.msra.mxu0 %v1334
    %1670 = vmatpush.msra.mxu0 %v1331
    %1671 = vmatmul.f32.gmra.mxu0 %v1227
    %v1672 = vpop.f32.mrf.mxu0
    %v1673 = vadd.f32 %v1650, %v1672
    %1674 = vmatmul.f32.gmra.mxu0 %v1231
    %v1675 = vpop.f32.mrf.mxu0
    %v1676 = vadd.f32 %v1653, %v1675
    %1677 = vdwg.mxu0
    %1678 = vmatpush.msra.mxu0 %v1424
    %1679 = vmatpush.msra.mxu0 %v1421
    %1680 = vmatpush.msra.mxu0 %v1418
    %1681 = vmatpush.msra.mxu0 %v1415
    %1682 = vmatpush.msra.mxu0 %v1412
    %1683 = vmatpush.msra.mxu0 %v1409
    %1684 = vmatpush.msra.mxu0 %v1406
    %1685 = vmatpush.msra.mxu0 %v1403
    %1686 = vmatpush.msra.mxu0 %v1400
    %1687 = vmatpush.msra.mxu0 %v1397
    %1688 = vmatpush.msra.mxu0 %v1394
    %1689 = vmatpush.msra.mxu0 %v1391
    %1690 = vmatpush.msra.mxu0 %v1388
    %1691 = vmatpush.msra.mxu0 %v1385
    %1692 = vmatpush.msra.mxu0 %v1382
    %1693 = vmatpush.msra.mxu0 %v1379
    %1694 = vmatmul.f32.gmra.mxu0 %v1228
    %v1695 = vpop.f32.mrf.mxu0
    %v1696 = vadd.f32 %v1673, %v1695
    %1697 = vmatmul.f32.gmra.mxu0 %v1232
    %v1698 = vpop.f32.mrf.mxu0
    %v1699 = vadd.f32 %v1676, %v1698
    %1700 = vdwg.mxu0
    %v1701 = vld [vmem:[%s6] sm:$0xff]
    %v1702 = vld [vmem:[%s6 + $0x8] sm:$0xff]
    %v1703 = vld [vmem:[%s6 + $0x10] sm:$0xff]
    %v1704 = vld [vmem:[%s6 + $0x18] sm:$0xff]
    %v1705 = vld [vmem:[%s6 + $0x20] sm:$0xff]
    %v1706 = vld [vmem:[%s6 + $0x28] sm:$0xff]
    %v1707 = vmul.f32 %v1512, %v1701
    %v1708 = vmul.f32 %v1604, %v1702
    %v1709 = vmul.f32 %v1696, %v1703
    %v1710 = vmul.f32 %v1515, %v1704
    %v1711 = vmul.f32 %v1607, %v1705
    %v1712 = vmul.f32 %v1699, %v1706
    %v1713 = vadd.f32 %v1707, %v1710
    %v1714 = vrot.slane %v1713, 4
    %v1715 = vadd.f32 %v1713, %v1714
    %v1716 = vrot.slane %v1715, 2
    %v1717 = vadd.f32 %v1715, %v1716
    %v1718 = vrot.slane %v1717, 1
    %v1719 = vadd.f32 %v1717, %v1718
    %v1720 = vadd.f32 %v1708, %v1711
    %v1721 = vrot.slane %v1720, 4
    %v1722 = vadd.f32 %v1720, %v1721
    %v1723 = vrot.slane %v1722, 2
    %v1724 = vadd.f32 %v1722, %v1723
    %v1725 = vrot.slane %v1724, 1
    %v1726 = vadd.f32 %v1724, %v1725
    %vm1727 = vcmask 261120
    %v1728 = vsel %vm1727, %v1709, 0.0
    %v1729 = vsel %vm1727, %v1712, 0.0
    %v1730 = vadd.f32 %v1728, %v1729
    %v1731 = vrot.slane %v1730, 4
    %v1732 = vadd.f32 %v1730, %v1731
    %v1733 = vrot.slane %v1732, 2
    %v1734 = vadd.f32 %v1732, %v1733
    %v1735 = vrot.slane %v1734, 1
    %v1736 = vadd.f32 %v1734, %v1735
    %1739 = vrot.lane.b32.xlu0 %v1726, 112
    %v1740 = vpop.permute.xlu0 %1739
    %1741 = vrot.lane.b32.xlu0 %v1736, 112
    %v1742 = vpop.permute.xlu0 %1741
    %vm1743 = vcmask 916480
    %v1744 = vsel %vm1743, %v1740, %v1742
    %vm1747 = vcmask 1040384
    %v1748 = vsel %vm1747, %v1719, %v1744
    %v1749 = vsel %vm1747, %v1726, %v1742
    %v1750 = vld [vmem:[%s7] sm:$0xff]
    %v1751 = vld [vmem:[%s7 + $0x8] sm:$0xff]
    %v1752 = vld [vmem:[%s7 + $0x10] sm:$0xff]
    %v1753 = vld [vmem:[%s7 + $0x18] sm:$0xff]
    %v1754 = vld [vmem:[%s7 + $0x20] sm:$0xff]
    %v1755 = vld [vmem:[%s7 + $0x28] sm:$0xff]
    %v1756 = vld [vmem:[%s7 + $0x30] sm:$0xff]
    %v1757 = vld [vmem:[%s7 + $0x38] sm:$0xff]
    %v1758 = vld [vmem:[%s7 + $0x40] sm:$0xff]
    %v1759 = vld [vmem:[%s7 + $0x48] sm:$0xff]
    %v1760 = vld [vmem:[%s7 + $0x50] sm:$0xff]
    %v1761 = vld [vmem:[%s7 + $0x58] sm:$0xff]
    %v1762 = vld [vmem:[%s7 + $0x60] sm:$0xff]
    %v1763 = vld [vmem:[%s7 + $0x68] sm:$0xff]
    %v1764 = vld [vmem:[%s7 + $0x70] sm:$0xff]
    %v1765 = vld [vmem:[%s7 + $0x78] sm:$0xff]
    %v1766 = vld [vmem:[%s7 + $0x80] sm:$0xff]
    %v1767 = vld [vmem:[%s7 + $0x88] sm:$0xff]
    %v1768 = vld [vmem:[%s8] sm:$0x1]
    %v1770 = vperm.slane %v1768, 0
    %vm1772 = vcmask 130048
    %v1774 = vsel %vm1772, %v1749, 0
    %1776 = vmatpush.msra.mxu0 %v1765
    %1777 = vmatpush.msra.mxu0 %v1764
    %1778 = vmatpush.msra.mxu0 %v1763
    %1779 = vmatpush.msra.mxu0 %v1762
    %1780 = vmatpush.msra.mxu0 %v1761
    %1781 = vmatpush.msra.mxu0 %v1760
    %1782 = vmatpush.msra.mxu0 %v1759
    %1783 = vmatpush.msra.mxu0 %v1758
    %1784 = vmatpush.msra.mxu0 %v1757
    %1785 = vmatpush.msra.mxu0 %v1756
    %1786 = vmatpush.msra.mxu0 %v1755
    %1787 = vmatpush.msra.mxu0 %v1754
    %1788 = vmatpush.msra.mxu0 %v1753
    %1789 = vmatpush.msra.mxu0 %v1752
    %1790 = vmatpush.msra.mxu0 %v1751
    %1791 = vmatpush.msra.mxu0 %v1750
    %1792 = vmatmul.f32.gmra.mxu0 %v1748
    %v1793 = vpop.f32.mrf.mxu0
    %v1794 = vadd.f32 %v1770, %v1793
    %1795 = vdwg.mxu0
    %1796 = vmatpush.msra.mxu0 0.0
    %1797 = vmatpush.msra.mxu0 0.0
    %1798 = vmatpush.msra.mxu0 0.0
    %1799 = vmatpush.msra.mxu0 0.0
    %1800 = vmatpush.msra.mxu0 0.0
    %1801 = vmatpush.msra.mxu0 0.0
    %1802 = vmatpush.msra.mxu0 0.0
    %1803 = vmatpush.msra.mxu0 0.0
    %1804 = vmatpush.msra.mxu0 0.0
    %1805 = vmatpush.msra.mxu0 0.0
    %1806 = vmatpush.msra.mxu0 0.0
    %1807 = vmatpush.msra.mxu0 0.0
    %1808 = vmatpush.msra.mxu0 0.0
    %1809 = vmatpush.msra.mxu0 0.0
    %1810 = vmatpush.msra.mxu0 %v1767
    %1811 = vmatpush.msra.mxu0 %v1766
    %1812 = vmatmul.f32.gmra.mxu0 %v1774
    %v1813 = vpop.f32.mrf.mxu0
    %v1814 = vadd.f32 %v1794, %v1813
    %1815 = vdwg.mxu0
    %v1816 = vmax.f32 %v1814, 0.0
    %v1817 = vld [vmem:[%s9] sm:$0xff]
    %v1818 = vld [vmem:[%s9 + $0x8] sm:$0xff]
    %v1819 = vld [vmem:[%s9 + $0x10] sm:$0xff]
    %v1820 = vld [vmem:[%s9 + $0x18] sm:$0xff]
    %v1821 = vld [vmem:[%s9 + $0x20] sm:$0xff]
    %v1822 = vld [vmem:[%s9 + $0x28] sm:$0xff]
    %v1823 = vld [vmem:[%s9 + $0x30] sm:$0xff]
    %v1824 = vld [vmem:[%s9 + $0x38] sm:$0xff]
    %v1825 = vld [vmem:[%s10] sm:$0x1]
    %v1827 = vperm.slane %v1825, 0
    %vm1829 = vcmask 523264
    %v1831 = vsel %vm1829, %v1816, 0
    %1833 = vmatpush.msra.mxu0 0.0
    %1834 = vmatpush.msra.mxu0 0.0
    %1835 = vmatpush.msra.mxu0 0.0
    %1836 = vmatpush.msra.mxu0 0.0
    %1837 = vmatpush.msra.mxu0 0.0
    %1838 = vmatpush.msra.mxu0 0.0
    %1839 = vmatpush.msra.mxu0 0.0
    %1840 = vmatpush.msra.mxu0 0.0
    %1841 = vmatpush.msra.mxu0 %v1824
    %1842 = vmatpush.msra.mxu0 %v1823
    %1843 = vmatpush.msra.mxu0 %v1822
    %1844 = vmatpush.msra.mxu0 %v1821
    %1845 = vmatpush.msra.mxu0 %v1820
    %1846 = vmatpush.msra.mxu0 %v1819
    %1847 = vmatpush.msra.mxu0 %v1818
    %1848 = vmatpush.msra.mxu0 %v1817
    %1849 = vmatmul.f32.gmra.mxu0 %v1831
    %v1850 = vpop.f32.mrf.mxu0
    %v1851 = vadd.f32 %v1827, %v1850
    %1852 = vdwg.mxu0
    %v1853 = vmax.f32 %v1851, 0.0
    %v1854 = vld [vmem:[%s11] sm:$0xff]
    %v1855 = vld [vmem:[%s11 + $0x8] sm:$0xff]
    %v1856 = vld [vmem:[%s11 + $0x10] sm:$0xff]
    %v1857 = vld [vmem:[%s11 + $0x18] sm:$0xff]
    %v1858 = vld [vmem:[%s12] sm:$0x1]
    %v1860 = vperm.slane %v1858, 0
    %v1863 = vsel %vm1727, %v1853, 0
    %1865 = vmatpush.msra.mxu0 0.0
    %1866 = vmatpush.msra.mxu0 0.0
    %1867 = vmatpush.msra.mxu0 0.0
    %1868 = vmatpush.msra.mxu0 0.0
    %1869 = vmatpush.msra.mxu0 0.0
    %1870 = vmatpush.msra.mxu0 0.0
    %1871 = vmatpush.msra.mxu0 0.0
    %1872 = vmatpush.msra.mxu0 0.0
    %1873 = vmatpush.msra.mxu0 0.0
    %1874 = vmatpush.msra.mxu0 0.0
    %1875 = vmatpush.msra.mxu0 0.0
    %1876 = vmatpush.msra.mxu0 0.0
    %1877 = vmatpush.msra.mxu0 %v1857
    %1878 = vmatpush.msra.mxu0 %v1856
    %1879 = vmatpush.msra.mxu0 %v1855
    %1880 = vmatpush.msra.mxu0 %v1854
    %1881 = vmatmul.f32.gmra.mxu0 %v1863
    %v1882 = vpop.f32.mrf.mxu0
    %v1883 = vadd.f32 %v1860, %v1882
    %1884 = vdwg.mxu0
    %vm1885 = vcmask 74752
    %1886 = vst.msk [vmem:[#allocation5] sm:$0x3] %vm1885, %v1883
    // Predicated region
    $region58: #{vanilla_cnn_forward.1} parent=1 // pred_check
      _
    $region59: #{vanilla_cnn_forward.1} parent=1 // pred_check_branch
      %1888 = sbr.rel (0) target = $region61
    $region60: #{vanilla_cnn_forward.1} parent=1 // pred_region
      %1890 = vsyncadd [#allocation4], 0
      %s1892 = sshll.u32 [#allocation5], 4
      %s1893 = int_to_ptr.vmem [resolvable:$true] %s1892
      %s1894 = sshll.u32 %s13, 4
      %s1895 = int_to_ptr.hbm [resolvable:$true] %s1894
      %1897 = dma.vmem_to_hbm [thread:$0]  %s1893, 32, %s1895, [#allocation4]
    $region61: #{vanilla_cnn_forward.1} parent=1 // pred_fallthru
      _
    // Predicated region
    $region62: #{vanilla_cnn_forward.1} parent=1 // pred_check
      _
    $region63: #{vanilla_cnn_forward.1} parent=1 // pred_check_branch
      %1899 = sbr.rel (0) target = $region65
    $region64: #{vanilla_cnn_forward.1} parent=1 // pred_region
      %1901 = dma.done [#allocation4], 32
    $region65: #{vanilla_cnn_forward.1} parent=1 // pred_fallthru
      _
    %1902 = vsyncpa [#allocation3], 1
    %1903 = vsyncpa [#allocation4], 1

</llo_original>
